<compile_context>
chip_gen: v6e
topology: v6e:2x2x1
jax: 0.10.0
libtpu: 0.0.40
codegen_flags: <defaults>
</compile_context>

<pallas_src>
import jax
import jax.numpy as jnp
from jax.experimental import pallas as pl
from jax.experimental.pallas import tpu as pltpu

LATDIM = 32          # args.latdim
EXPERT_NUM = 4       # args.expert_num
TEMPERATURE = 0.7    # args.temperature
LN_EPS = 1e-5
LANES = 128
# TODO(synk): gumbel-noise gating (args.add_noise) and Dropout(p=0.5) are training-only /
#             non-deterministic branches; this kernel implements the eval-mode forward.


def _layer_norm(x, gamma, beta):
    mu = jnp.mean(x, axis=-1, keepdims=True)
    var = jnp.mean((x - mu) ** 2, axis=-1, keepdims=True)
    return (x - mu) * jax.lax.rsqrt(var + LN_EPS) * gamma + beta


def graph_moe_kernel(x_ref, sg_ref, small_ref, a_ref, w1_ref, w2_ref, w3_ref,
                     bias_ref, exp_ref, ssum_ref, sel_ref, out_ref):
    bf = jnp.bfloat16
    d2e = w1_ref.shape[1]          # e * 2d
    de = ssum_ref.shape[0]         # e * d
    m = out_ref.shape[0]

    small = small_ref[...]                                         # (6, d) f32
    gx, bx, gs, bs = small[0:1], small[1:2], small[2:3], small[3:4]
    lin_w = small[4:5]
    lin_b = small[5:6, 0:1]

    # ---- gating: computed exactly once (no expert grid axis) ----
    xn = _layer_norm(x_ref[...], gx, bx)                           # (n, d)  self.norm(x)
    sgn = _layer_norm(sg_ref[...], gs, bs)                         # (e, d)  slot_norm(softgate)
    logits = jnp.dot(xn, sgn.T, preferred_element_type=jnp.float32) / TEMPERATURE
    w = jax.nn.softmax(logits, axis=-1)                            # (n, e)  dispatch == combine

    # broadcast each expert's gate across its lane block (bf16 0/1 expansion matmuls)
    w_bf = w.astype(bf)
    expand = exp_ref[...]                                          # (e, e*2d + e*d) bf16
    w2d = jnp.dot(w_bf, expand[:, :d2e], preferred_element_type=jnp.float32)   # (n, e*2d)
    wd = jnp.dot(w_bf, expand[:, d2e:], preferred_element_type=jnp.float32)    # (n, e*d)

    a = a_ref[...]                                                 # (n, n) bf16 normalized adjacency
    biases = bias_ref[...]                                         # (3, e*2d) f32
    b1 = biases[0:1, :]
    b2 = biases[1:2, :]
    b3 = biases[2:3, :de]

    # ---- expert GCNs, expert axis folded into lanes ----
    # layer 1: relu(A @ ((xn * gate_e) @ W1_e) + b1_e) for all experts at once
    p = jnp.dot(xn.astype(bf), w1_ref[...], preferred_element_type=jnp.float32)   # (n, e*2d)
    p = p * w2d
    h = jnp.maximum(jnp.dot(a, p.astype(bf), preferred_element_type=jnp.float32) + b1, 0.0)
    # layer 2 (block-diagonal stacked weight)
    p = jnp.dot(h.astype(bf), w2_ref[...], preferred_element_type=jnp.float32)    # (n, e*2d)
    h = jnp.maximum(jnp.dot(a, p.astype(bf), preferred_element_type=jnp.float32) + b2, 0.0)
    # layer 3 (block-diagonal stacked weight)
    p = jnp.dot(h.astype(bf), w3_ref[...], preferred_element_type=jnp.float32)    # (n, e*d)
    h = jnp.maximum(jnp.dot(a, p.astype(bf), preferred_element_type=jnp.float32) + b3, 0.0)

    # ---- fused: expert-weighted combine + one-hot endpoint gather + edge predictor ----
    hw = (h * wd).astype(bf)                                                      # (n, e*d)
    pairs = jnp.dot(sel_ref[...], hw, preferred_element_type=jnp.float32)          # (2m, e*d)
    hc = jnp.dot(pairs.astype(bf), ssum_ref[...], preferred_element_type=jnp.float32)  # (2m, d)
    hs, hd = hc[:m], hc[m:]                                        # gathered src / dst embeddings
    # lin_pred(h_src * h_dst): lane reduction on the VPU/XLU (no thin (d,1) matmul)
    pred = jnp.sum(hs * hd * lin_w, axis=-1, keepdims=True) + lin_b                # (m, 1)
    out_ref[...] = jnp.broadcast_to(pred, out_ref.shape)           # lane-dense writeback


def _block_diag(ws):
    """(e, i, j) stacked per-expert weights -> (e*i, e*j) block-diagonal matrix."""
    e, i, j = ws.shape
    eye = jnp.eye(e, dtype=ws.dtype)
    return jnp.einsum('ab,aij->aibj', eye, ws).reshape(e * i, e * j)


def _vmem_limit_bytes():
    phys = 64 * 1024 * 1024
    try:
        phys = int(pltpu.get_tpu_info().vmem_capacity_bytes)
    except Exception:
        pass
    # ~96 MiB on v5e/v6e (128 MiB physical), 48 MiB on v7x (64 MiB per TC).
    return min((phys * 3) // 4, 112 * 1024 * 1024)


def graph_moe_forward(x, a_norm, edge_label_index, params):
    n, d = x.shape
    e = EXPERT_NUM
    d2 = 2 * d
    m = edge_label_index.shape[1]
    f32 = jnp.float32
    bf = jnp.bfloat16

    # ---- parameter restaging (layout plumbing, done once per call) ----
    w1cat = jnp.transpose(params["w1"], (1, 0, 2)).reshape(d, e * d2)        # (d, e*2d)
    # TODO(synk): if latdim grows so that e*2d >= 512, replace the dense block-diagonal
    #             W2/W3 (75% zeros) with a per-expert fori_loop / batched einsum.
    w2bd = _block_diag(params["w2"])                                         # (e*2d, e*2d)
    w3bd = _block_diag(params["w3"])                                         # (e*2d, e*d)

    biases = jnp.concatenate([
        params["b1"].reshape(1, e * d2),
        params["b2"].reshape(1, e * d2),
        jnp.pad(params["b3"].reshape(1, e * d), ((0, 0), (0, e * d2 - e * d))),
    ], axis=0).astype(f32)                                                   # (3, e*2d)

    small = jnp.concatenate([
        params["gx"], params["bx"], params["gs"], params["bs"],
        params["lin_w"],
        jnp.pad(params["lin_b"], ((0, 0), (0, d - 1))),
    ], axis=0).astype(f32)                                                   # (6, d)

    e2d = jnp.repeat(jnp.eye(e, dtype=f32), d2, axis=1)                      # (e, e*2d)
    ed = jnp.repeat(jnp.eye(e, dtype=f32), d, axis=1)                        # (e, e*d)
    expand = jnp.concatenate([e2d, ed], axis=1).astype(bf)                   # (e, e*3d)
    ssum = jnp.tile(jnp.eye(d, dtype=f32), (e, 1)).astype(bf)                # (e*d, d) block-sum

    # one-hot endpoint selection: fuses out[edge_label_index[0/1]] into the kernel (MXU gather)
    sel = jax.nn.one_hot(
        jnp.concatenate([edge_label_index[0], edge_label_index[1]], axis=0),
        n, dtype=f32).astype(bf)                                             # (2m, n)

    # bf16 operands for the MXU / adjacency DMA; accumulation stays f32 in-kernel.
    a_bf = a_norm.astype(bf)
    w1_bf = w1cat.astype(bf)
    w2_bf = w2bd.astype(bf)
    w3_bf = w3bd.astype(bf)

    def full(shp):
        return pl.BlockSpec(shp, lambda: (0,) * len(shp))

    pred = pl.pallas_call(
        graph_moe_kernel,
        out_shape=jax.ShapeDtypeStruct((m, LANES), jnp.float32),
        in_specs=[
            full((n, d)), full((e, d)), full((6, d)),
            full((n, n)),
            full((d, e * d2)), full((e * d2, e * d2)), full((e * d2, e * d)),
            full((3, e * d2)), full((e, e * d2 + e * d)), full((e * d, d)),
            full((2 * m, n)),
        ],
        out_specs=full((m, LANES)),
        compiler_params=pltpu.CompilerParams(vmem_limit_bytes=_vmem_limit_bytes()),
    )(x, params["softgate"], small, a_bf, w1_bf, w2_bf, w3_bf,
      biases, expand, ssum, sel)

    return pred[:, 0]   # .squeeze(-1)


if __name__ == "__main__":
    key = jax.random.PRNGKey(0)
    n, d, e = 64, LATDIM, EXPERT_NUM
    num_edges, m = 128, 16
    keys = jax.random.split(key, 9)

    x = jax.random.normal(keys[0], (n, d), jnp.float32)
    src = jax.random.randint(keys[1], (num_edges,), 0, n)
    dst = jax.random.randint(keys[2], (num_edges,), 0, n)
    edge_label_index = jax.random.randint(keys[3], (2, m), 0, n)

    # glue: dense GCN-normalized adjacency with self loops: D^-1/2 (A + I) D^-1/2
    a = jnp.zeros((n, n), jnp.float32).at[dst, src].set(1.0)
    a_hat = jnp.maximum(a, jnp.eye(n, dtype=jnp.float32))
    deg = jnp.sum(a_hat, axis=1)
    dinv = jax.lax.rsqrt(jnp.maximum(deg, 1.0))
    a_norm = a_hat * dinv[:, None] * dinv[None, :]

    params = {
        # self.softgate = Parameter(randn(expert_num, latdim))
        "softgate": jax.random.normal(keys[4], (e, d), jnp.float32),
        # LayerNorm(latdim) x2 (weight=1, bias=0)
        "gx": jnp.ones((1, d), jnp.float32), "bx": jnp.zeros((1, d), jnp.float32),
        "gs": jnp.ones((1, d), jnp.float32), "bs": jnp.zeros((1, d), jnp.float32),
        # per-expert GCNConv weights: latdim->2*latdim->2*latdim->latdim
        "w1": 0.1 * jax.random.normal(keys[5], (e, d, 2 * d), jnp.float32),
        "b1": jnp.zeros((e, 1, 2 * d), jnp.float32),
        "w2": 0.1 * jax.random.normal(keys[6], (e, 2 * d, 2 * d), jnp.float32),
        "b2": jnp.zeros((e, 1, 2 * d), jnp.float32),
        "w3": 0.1 * jax.random.normal(keys[7], (e, 2 * d, d), jnp.float32),
        "b3": jnp.zeros((e, 1, d), jnp.float32),
        # lin_pred = Linear(latdim, 1)
        "lin_w": 0.1 * jax.random.normal(keys[8], (1, d), jnp.float32),
        "lin_b": jnp.zeros((1, 1), jnp.float32),
    }

    out = graph_moe_forward(x, a_norm, edge_label_index, params)
    jax.block_until_ready(out)
    assert out.shape == (m,)
    assert bool(jnp.all(jnp.isfinite(out)))
    print("KERNEL_OK")
</pallas_src>

<mosaic_0001>
module attributes {stable_mosaic.version = 11 : i64} {
  func.func @graph_moe_kernel(%arg0: memref<64x32xf32, #tpu.memory_space<vmem>>, %arg1: memref<4x32xf32, #tpu.memory_space<vmem>>, %arg2: memref<6x32xf32, #tpu.memory_space<vmem>>, %arg3: memref<64x64xbf16, #tpu.memory_space<vmem>>, %arg4: memref<32x256xbf16, #tpu.memory_space<vmem>>, %arg5: memref<256x256xbf16, #tpu.memory_space<vmem>>, %arg6: memref<256x128xbf16, #tpu.memory_space<vmem>>, %arg7: memref<3x256xf32, #tpu.memory_space<vmem>>, %arg8: memref<4x384xbf16, #tpu.memory_space<vmem>>, %arg9: memref<128x32xbf16, #tpu.memory_space<vmem>>, %arg10: memref<32x64xbf16, #tpu.memory_space<vmem>>, %arg11: memref<16x128xf32, #tpu.memory_space<vmem>>) attributes {dimension_semantics = [], scalar_prefetch = 0 : i64, scratch_operands = 0 : i64, tpu.core_type = #tpu.core_type<tc>} {
    %c0 = arith.constant 0 : index
    %c0_0 = arith.constant 0 : index
    %0 = vector.load %arg2[%c0, %c0_0] : memref<6x32xf32, #tpu.memory_space<vmem>>, vector<6x32xf32>
    %1 = vector.extract_strided_slice %0 {offsets = [0, 0], sizes = [1, 32], strides = [1, 1]} : vector<6x32xf32> to vector<1x32xf32>
    %2 = vector.extract_strided_slice %0 {offsets = [1, 0], sizes = [1, 32], strides = [1, 1]} : vector<6x32xf32> to vector<1x32xf32>
    %3 = vector.extract_strided_slice %0 {offsets = [2, 0], sizes = [1, 32], strides = [1, 1]} : vector<6x32xf32> to vector<1x32xf32>
    %4 = vector.extract_strided_slice %0 {offsets = [3, 0], sizes = [1, 32], strides = [1, 1]} : vector<6x32xf32> to vector<1x32xf32>
    %5 = vector.extract_strided_slice %0 {offsets = [4, 0], sizes = [1, 32], strides = [1, 1]} : vector<6x32xf32> to vector<1x32xf32>
    %6 = vector.extract_strided_slice %0 {offsets = [5, 0], sizes = [1, 1], strides = [1, 1]} : vector<6x32xf32> to vector<1x1xf32>
    %c0_1 = arith.constant 0 : index
    %c0_2 = arith.constant 0 : index
    %7 = vector.load %arg0[%c0_1, %c0_2] : memref<64x32xf32, #tpu.memory_space<vmem>>, vector<64x32xf32>
    %cst = arith.constant dense<0.000000e+00> : vector<64xf32>
    %8 = vector.multi_reduction <add>, %7, %cst [1] : vector<64x32xf32> to vector<64xf32>
    %9 = vector.shape_cast %8 : vector<64xf32> to vector<64x1xf32>
    %cst_3 = arith.constant 3.200000e+01 : f32
    %10 = vector.broadcast %cst_3 : f32 to vector<64x1xf32>
    %11 = arith.divf %9, %10 : vector<64x1xf32>
    %12 = vector.broadcast %11 : vector<64x1xf32> to vector<64x32xf32>
    %13 = arith.subf %7, %12 : vector<64x32xf32>
    %14 = arith.mulf %13, %13 : vector<64x32xf32>
    %cst_4 = arith.constant dense<0.000000e+00> : vector<64xf32>
    %15 = vector.multi_reduction <add>, %14, %cst_4 [1] : vector<64x32xf32> to vector<64xf32>
    %16 = vector.shape_cast %15 : vector<64xf32> to vector<64x1xf32>
    %cst_5 = arith.constant 3.200000e+01 : f32
    %17 = vector.broadcast %cst_5 : f32 to vector<64x1xf32>
    %18 = arith.divf %16, %17 : vector<64x1xf32>
    %19 = vector.broadcast %11 : vector<64x1xf32> to vector<64x32xf32>
    %20 = arith.subf %7, %19 : vector<64x32xf32>
    %cst_6 = arith.constant 9.99999974E-6 : f32
    %21 = vector.broadcast %cst_6 : f32 to vector<64x1xf32>
    %22 = arith.addf %18, %21 : vector<64x1xf32>
    %23 = math.rsqrt %22 : vector<64x1xf32>
    %24 = vector.broadcast %23 : vector<64x1xf32> to vector<64x32xf32>
    %25 = arith.mulf %20, %24 : vector<64x32xf32>
    %26 = vector.broadcast %1 : vector<1x32xf32> to vector<64x32xf32>
    %27 = arith.mulf %25, %26 : vector<64x32xf32>
    %28 = vector.broadcast %2 : vector<1x32xf32> to vector<64x32xf32>
    %29 = arith.addf %27, %28 : vector<64x32xf32>
    %c0_7 = arith.constant 0 : index
    %c0_8 = arith.constant 0 : index
    %30 = vector.load %arg1[%c0_7, %c0_8] : memref<4x32xf32, #tpu.memory_space<vmem>>, vector<4x32xf32>
    %cst_9 = arith.constant dense<0.000000e+00> : vector<4xf32>
    %31 = vector.multi_reduction <add>, %30, %cst_9 [1] : vector<4x32xf32> to vector<4xf32>
    %32 = vector.shape_cast %31 : vector<4xf32> to vector<4x1xf32>
    %cst_10 = arith.constant 3.200000e+01 : f32
    %33 = vector.broadcast %cst_10 : f32 to vector<4x1xf32>
    %34 = arith.divf %32, %33 : vector<4x1xf32>
    %35 = vector.broadcast %34 : vector<4x1xf32> to vector<4x32xf32>
    %36 = arith.subf %30, %35 : vector<4x32xf32>
    %37 = arith.mulf %36, %36 : vector<4x32xf32>
    %cst_11 = arith.constant dense<0.000000e+00> : vector<4xf32>
    %38 = vector.multi_reduction <add>, %37, %cst_11 [1] : vector<4x32xf32> to vector<4xf32>
    %39 = vector.shape_cast %38 : vector<4xf32> to vector<4x1xf32>
    %cst_12 = arith.constant 3.200000e+01 : f32
    %40 = vector.broadcast %cst_12 : f32 to vector<4x1xf32>
    %41 = arith.divf %39, %40 : vector<4x1xf32>
    %42 = vector.broadcast %34 : vector<4x1xf32> to vector<4x32xf32>
    %43 = arith.subf %30, %42 : vector<4x32xf32>
    %cst_13 = arith.constant 9.99999974E-6 : f32
    %44 = vector.broadcast %cst_13 : f32 to vector<4x1xf32>
    %45 = arith.addf %41, %44 : vector<4x1xf32>
    %46 = math.rsqrt %45 : vector<4x1xf32>
    %47 = vector.broadcast %46 : vector<4x1xf32> to vector<4x32xf32>
    %48 = arith.mulf %43, %47 : vector<4x32xf32>
    %49 = vector.broadcast %3 : vector<1x32xf32> to vector<4x32xf32>
    %50 = arith.mulf %48, %49 : vector<4x32xf32>
    %51 = vector.broadcast %4 : vector<1x32xf32> to vector<4x32xf32>
    %52 = arith.addf %50, %51 : vector<4x32xf32>
    %53 = tpu.transpose %52, [1, 0] : vector<4x32xf32> -> vector<32x4xf32>
    %cst_14 = arith.constant dense<0.000000e+00> : vector<64x4xf32>
    %54 = tpu.matmul %29, %53, %cst_14 {dimension_numbers = #tpu.dot_dimension_numbers<[1], [0], [0], [1], [0, 0, 1, 1], [], []>} : vector<64x32xf32>, vector<32x4xf32>, vector<64x4xf32> -> vector<64x4xf32>
    %cst_15 = arith.constant 0.699999988 : f32
    %55 = vector.broadcast %cst_15 : f32 to vector<64x4xf32>
    %56 = arith.divf %54, %55 : vector<64x4xf32>
    %cst_16 = arith.constant dense<0xFF800000> : vector<64xf32>
    %57 = vector.multi_reduction <maximumf>, %56, %cst_16 [1] : vector<64x4xf32> to vector<64xf32>
    %cst_17 = arith.constant 0xFF800000 : f32
    %58 = vector.broadcast %cst_17 : f32 to vector<64xf32>
    %59 = arith.maximumf %58, %57 : vector<64xf32>
    %60 = vector.shape_cast %59 : vector<64xf32> to vector<64x1xf32>
    %61 = vector.broadcast %60 : vector<64x1xf32> to vector<64x4xf32>
    %62 = arith.subf %56, %61 : vector<64x4xf32>
    %63 = math.exp %62 : vector<64x4xf32>
    %cst_18 = arith.constant dense<0.000000e+00> : vector<64xf32>
    %64 = vector.multi_reduction <add>, %63, %cst_18 [1] : vector<64x4xf32> to vector<64xf32>
    %65 = vector.shape_cast %64 : vector<64xf32> to vector<64x1xf32>
    %66 = vector.broadcast %65 : vector<64x1xf32> to vector<64x4xf32>
    %67 = arith.divf %63, %66 : vector<64x4xf32>
    %68 = arith.truncf %67 : vector<64x4xf32> to vector<64x4xbf16>
    %c0_19 = arith.constant 0 : index
    %c0_20 = arith.constant 0 : index
    %69 = vector.load %arg8[%c0_19, %c0_20] : memref<4x384xbf16, #tpu.memory_space<vmem>>, vector<4x384xbf16>
    %70 = vector.extract_strided_slice %69 {offsets = [0, 0], sizes = [4, 256], strides = [1, 1]} : vector<4x384xbf16> to vector<4x256xbf16>
    %cst_21 = arith.constant dense<0.000000e+00> : vector<64x256xf32>
    %71 = tpu.matmul %68, %70, %cst_21 {dimension_numbers = #tpu.dot_dimension_numbers<[1], [0], [0], [1], [0, 0, 1, 1], [], []>} : vector<64x4xbf16>, vector<4x256xbf16>, vector<64x256xf32> -> vector<64x256xf32>
    %72 = vector.extract_strided_slice %69 {offsets = [0, 256], sizes = [4, 128], strides = [1, 1]} : vector<4x384xbf16> to vector<4x128xbf16>
    %cst_22 = arith.constant dense<0.000000e+00> : vector<64x128xf32>
    %73 = tpu.matmul %68, %72, %cst_22 {dimension_numbers = #tpu.dot_dimension_numbers<[1], [0], [0], [1], [0, 0, 1, 1], [], []>} : vector<64x4xbf16>, vector<4x128xbf16>, vector<64x128xf32> -> vector<64x128xf32>
    %c0_23 = arith.constant 0 : index
    %c0_24 = arith.constant 0 : index
    %74 = vector.load %arg3[%c0_23, %c0_24] : memref<64x64xbf16, #tpu.memory_space<vmem>>, vector<64x64xbf16>
    %c0_25 = arith.constant 0 : index
    %c0_26 = arith.constant 0 : index
    %75 = vector.load %arg7[%c0_25, %c0_26] : memref<3x256xf32, #tpu.memory_space<vmem>>, vector<3x256xf32>
    %76 = vector.extract_strided_slice %75 {offsets = [0, 0], sizes = [1, 256], strides = [1, 1]} : vector<3x256xf32> to vector<1x256xf32>
    %77 = vector.extract_strided_slice %75 {offsets = [1, 0], sizes = [1, 256], strides = [1, 1]} : vector<3x256xf32> to vector<1x256xf32>
    %78 = vector.extract_strided_slice %75 {offsets = [2, 0], sizes = [1, 128], strides = [1, 1]} : vector<3x256xf32> to vector<1x128xf32>
    %79 = arith.truncf %29 : vector<64x32xf32> to vector<64x32xbf16>
    %c0_27 = arith.constant 0 : index
    %c0_28 = arith.constant 0 : index
    %80 = vector.load %arg4[%c0_27, %c0_28] : memref<32x256xbf16, #tpu.memory_space<vmem>>, vector<32x256xbf16>
    %cst_29 = arith.constant dense<0.000000e+00> : vector<64x256xf32>
    %81 = tpu.matmul %79, %80, %cst_29 {dimension_numbers = #tpu.dot_dimension_numbers<[1], [0], [0], [1], [0, 0, 1, 1], [], []>} : vector<64x32xbf16>, vector<32x256xbf16>, vector<64x256xf32> -> vector<64x256xf32>
    %82 = arith.mulf %81, %71 : vector<64x256xf32>
    %83 = arith.truncf %82 : vector<64x256xf32> to vector<64x256xbf16>
    %cst_30 = arith.constant dense<0.000000e+00> : vector<64x256xf32>
    %84 = tpu.matmul %74, %83, %cst_30 {dimension_numbers = #tpu.dot_dimension_numbers<[1], [0], [0], [1], [0, 0, 1, 1], [], []>} : vector<64x64xbf16>, vector<64x256xbf16>, vector<64x256xf32> -> vector<64x256xf32>
    %85 = vector.broadcast %76 : vector<1x256xf32> to vector<64x256xf32>
    %86 = arith.addf %84, %85 : vector<64x256xf32>
    %cst_31 = arith.constant 0.000000e+00 : f32
    %87 = vector.broadcast %cst_31 : f32 to vector<64x256xf32>
    %88 = arith.maximumf %86, %87 : vector<64x256xf32>
    %89 = arith.truncf %88 : vector<64x256xf32> to vector<64x256xbf16>
    %c0_32 = arith.constant 0 : index
    %c0_33 = arith.constant 0 : index
    %90 = vector.load %arg5[%c0_32, %c0_33] : memref<256x256xbf16, #tpu.memory_space<vmem>>, vector<256x256xbf16>
    %cst_34 = arith.constant dense<0.000000e+00> : vector<64x256xf32>
    %91 = tpu.matmul %89, %90, %cst_34 {dimension_numbers = #tpu.dot_dimension_numbers<[1], [0], [0], [1], [0, 0, 1, 1], [], []>} : vector<64x256xbf16>, vector<256x256xbf16>, vector<64x256xf32> -> vector<64x256xf32>
    %92 = arith.truncf %91 : vector<64x256xf32> to vector<64x256xbf16>
    %cst_35 = arith.constant dense<0.000000e+00> : vector<64x256xf32>
    %93 = tpu.matmul %74, %92, %cst_35 {dimension_numbers = #tpu.dot_dimension_numbers<[1], [0], [0], [1], [0, 0, 1, 1], [], []>} : vector<64x64xbf16>, vector<64x256xbf16>, vector<64x256xf32> -> vector<64x256xf32>
    %94 = vector.broadcast %77 : vector<1x256xf32> to vector<64x256xf32>
    %95 = arith.addf %93, %94 : vector<64x256xf32>
    %cst_36 = arith.constant 0.000000e+00 : f32
    %96 = vector.broadcast %cst_36 : f32 to vector<64x256xf32>
    %97 = arith.maximumf %95, %96 : vector<64x256xf32>
    %98 = arith.truncf %97 : vector<64x256xf32> to vector<64x256xbf16>
    %c0_37 = arith.constant 0 : index
    %c0_38 = arith.constant 0 : index
    %99 = vector.load %arg6[%c0_37, %c0_38] : memref<256x128xbf16, #tpu.memory_space<vmem>>, vector<256x128xbf16>
    %cst_39 = arith.constant dense<0.000000e+00> : vector<64x128xf32>
    %100 = tpu.matmul %98, %99, %cst_39 {dimension_numbers = #tpu.dot_dimension_numbers<[1], [0], [0], [1], [0, 0, 1, 1], [], []>} : vector<64x256xbf16>, vector<256x128xbf16>, vector<64x128xf32> -> vector<64x128xf32>
    %101 = arith.truncf %100 : vector<64x128xf32> to vector<64x128xbf16>
    %cst_40 = arith.constant dense<0.000000e+00> : vector<64x128xf32>
    %102 = tpu.matmul %74, %101, %cst_40 {dimension_numbers = #tpu.dot_dimension_numbers<[1], [0], [0], [1], [0, 0, 1, 1], [], []>} : vector<64x64xbf16>, vector<64x128xbf16>, vector<64x128xf32> -> vector<64x128xf32>
    %103 = vector.broadcast %78 : vector<1x128xf32> to vector<64x128xf32>
    %104 = arith.addf %102, %103 : vector<64x128xf32>
    %cst_41 = arith.constant 0.000000e+00 : f32
    %105 = vector.broadcast %cst_41 : f32 to vector<64x128xf32>
    %106 = arith.maximumf %104, %105 : vector<64x128xf32>
    %107 = arith.mulf %106, %73 : vector<64x128xf32>
    %108 = arith.truncf %107 : vector<64x128xf32> to vector<64x128xbf16>
    %c0_42 = arith.constant 0 : index
    %c0_43 = arith.constant 0 : index
    %109 = vector.load %arg10[%c0_42, %c0_43] : memref<32x64xbf16, #tpu.memory_space<vmem>>, vector<32x64xbf16>
    %cst_44 = arith.constant dense<0.000000e+00> : vector<32x128xf32>
    %110 = tpu.matmul %109, %108, %cst_44 {dimension_numbers = #tpu.dot_dimension_numbers<[1], [0], [0], [1], [0, 0, 1, 1], [], []>} : vector<32x64xbf16>, vector<64x128xbf16>, vector<32x128xf32> -> vector<32x128xf32>
    %111 = arith.truncf %110 : vector<32x128xf32> to vector<32x128xbf16>
    %c0_45 = arith.constant 0 : index
    %c0_46 = arith.constant 0 : index
    %112 = vector.load %arg9[%c0_45, %c0_46] : memref<128x32xbf16, #tpu.memory_space<vmem>>, vector<128x32xbf16>
    %cst_47 = arith.constant dense<0.000000e+00> : vector<32x32xf32>
    %113 = tpu.matmul %111, %112, %cst_47 {dimension_numbers = #tpu.dot_dimension_numbers<[1], [0], [0], [1], [0, 0, 1, 1], [], []>} : vector<32x128xbf16>, vector<128x32xbf16>, vector<32x32xf32> -> vector<32x32xf32>
    %114 = vector.extract_strided_slice %113 {offsets = [0, 0], sizes = [16, 32], strides = [1, 1]} : vector<32x32xf32> to vector<16x32xf32>
    %115 = vector.extract_strided_slice %113 {offsets = [16, 0], sizes = [16, 32], strides = [1, 1]} : vector<32x32xf32> to vector<16x32xf32>
    %116 = arith.mulf %114, %115 : vector<16x32xf32>
    %117 = vector.broadcast %5 : vector<1x32xf32> to vector<16x32xf32>
    %118 = arith.mulf %116, %117 : vector<16x32xf32>
    %cst_48 = arith.constant dense<0.000000e+00> : vector<16xf32>
    %119 = vector.multi_reduction <add>, %118, %cst_48 [1] : vector<16x32xf32> to vector<16xf32>
    %120 = vector.shape_cast %119 : vector<16xf32> to vector<16x1xf32>
    %121 = vector.broadcast %6 : vector<1x1xf32> to vector<16x1xf32>
    %122 = arith.addf %120, %121 : vector<16x1xf32>
    %123 = vector.shape_cast %122 : vector<16x1xf32> to vector<16x1xf32>
    %124 = vector.broadcast %123 : vector<16x1xf32> to vector<16x128xf32>
    %c0_49 = arith.constant 0 : index
    %c0_50 = arith.constant 0 : index
    %125 = vector.load %arg11[%c0_49, %c0_50] : memref<16x128xf32, #tpu.memory_space<vmem>>, vector<16x128xf32>
    tpu.vector_store %arg11[%c0_49, %c0_50], %124 {strides = array<i32>} : memref<16x128xf32, #tpu.memory_space<vmem>>, vector<16x128xf32>,
    return
  }
}

</mosaic_0001>

<llo_original>
// kernel: tpu_custom_call.1
$region0: #{tpu_custom_call.1}
  #allocation0 [shape = 'u32[]', space=smem, size = 0x4, offset = 0x4, fixed_abs, tag = 'smem constant byte address 0x4 - core index']
  #allocation1 [shape = 'u32[144,128]{1,0:T(1,128)}', space=vmem, size = 0x12000, scoped, tag = 'internal scratch']
  %s0 = inlined_call_operand.vmem [shape: f32[64,32], index: 0, kind: input, shape index: {}]
  %s1 = inlined_call_operand.hbm [shape: f32[4,32], index: 1, kind: input, shape index: {}]
  %s2 = inlined_call_operand.hbm [shape: f32[6,32], index: 2, kind: input, shape index: {}]
  %s3 = inlined_call_operand.vmem [shape: bf16[64,64], index: 3, kind: input, shape index: {}]
  %s4 = inlined_call_operand.hbm [shape: bf16[32,256], index: 4, kind: input, shape index: {}]
  %s5 = inlined_call_operand.hbm [shape: bf16[256,256], index: 5, kind: input, shape index: {}]
  %s6 = inlined_call_operand.vmem [shape: bf16[256,128], index: 6, kind: input, shape index: {}]
  %s7 = inlined_call_operand.hbm [shape: f32[3,256], index: 7, kind: input, shape index: {}]
  %s8 = inlined_call_operand.hbm [shape: bf16[4,384], index: 8, kind: input, shape index: {}]
  %s9 = inlined_call_operand.vmem [shape: bf16[128,32], index: 9, kind: input, shape index: {}]
  %s10 = inlined_call_operand.vmem [shape: bf16[32,64], index: 10, kind: input, shape index: {}]
  %s11 = inlined_call_operand.hbm [shape: f32[16,128], index: 11, kind: output, shape index: {}]
  %s12 = sld [smem:[#allocation0]]
  $region78: #{tpu_custom_call.1} parent=0
    _
  %s14 = ssub.s32 1, %s12
  %s15 = scalar_select 0, %s14, %s12
  $region1: #{tpu_custom_call.1} parent=0
    #allocation2 [shape = 'u8[2048]{0}', space=vmem, size = 0x800, scoped, tag = 'input window, operand 1, single buffered']
    #allocation3 [shape = 's32[1]{0}', space=sflag, size = 0x4, scoped, tag = 'scoped memory for tpu_custom_call.1']
    #allocation4 [shape = 's32[1]{0}', space=sflag, size = 0x4, scoped, tag = 'scoped memory for tpu_custom_call.1']
    #allocation5 [shape = 'u8[4096]{0}', space=vmem, size = 0x1000, scoped, tag = 'input window, operand 2, single buffered']
    #allocation6 [shape = 's32[1]{0}', space=sflag, size = 0x4, scoped, tag = 'scoped memory for tpu_custom_call.1']
    #allocation7 [shape = 'u8[16384]{0}', space=vmem, size = 0x4000, scoped, tag = 'input window, operand 4, single buffered']
    #allocation8 [shape = 'u8[131072]{0}', space=vmem, size = 0x20000, scoped, tag = 'input window, operand 5, single buffered']
    #allocation9 [shape = 's32[1]{0}', space=sflag, size = 0x4, scoped, tag = 'scoped memory for tpu_custom_call.1']
    #allocation10 [shape = 'u8[4096]{0}', space=vmem, size = 0x1000, scoped, tag = 'input window, operand 7, single buffered']
    #allocation11 [shape = 'u8[3072]{0}', space=vmem, size = 0xc00, scoped, tag = 'input window, operand 8, single buffered']
    #allocation12 [shape = 's32[1]{0}', space=sflag, size = 0x4, scoped, tag = 'scoped memory for tpu_custom_call.1']
    #allocation13 [shape = 'u8[8192]{0}', space=vmem, size = 0x2000, scoped, tag = 'output window, operand 0, single buffered']
    %16 = vsyncpa [#allocation3], 0
    %17 = vsyncpa [#allocation6], 0
    %18 = vsyncpa [#allocation9], 0
    %19 = vsyncpa [#allocation12], 0
    %20 = vsyncpa [#allocation4], 0
    // Predicated region
    $region2: #{tpu_custom_call.1} parent=1 // pred_check
      _
    $region3: #{tpu_custom_call.1} parent=1 // pred_check_branch
      %22 = sbr.rel (0) target = $region5
    $region4: #{tpu_custom_call.1} parent=1 // pred_region
      _
    $region5: #{tpu_custom_call.1} parent=1 // pred_fallthru
      _
    // Predicated region
    $region6: #{tpu_custom_call.1} parent=1 // pred_check
      _
    $region7: #{tpu_custom_call.1} parent=1 // pred_check_branch
      %24 = sbr.rel (0) target = $region9
    $region8: #{tpu_custom_call.1} parent=1 // pred_region
      %s26 = ssub.s32 64, 64
      %27 = vsyncadd [#allocation3], %s26
      %s29 = sshll.u32 [#allocation2], 4
      %s30 = int_to_ptr.vmem [resolvable:$true] %s29
      %32 = dma.hbm_to_vmem [thread:$0]  %s1, 64, %s30, [#allocation3]
    $region9: #{tpu_custom_call.1} parent=1 // pred_fallthru
      _
    // Predicated region
    $region10: #{tpu_custom_call.1} parent=1 // pred_check
      _
    $region11: #{tpu_custom_call.1} parent=1 // pred_check_branch
      %34 = sbr.rel (0) target = $region13
    $region12: #{tpu_custom_call.1} parent=1 // pred_region
      %s36 = ssub.s32 128, 128
      %37 = vsyncadd [#allocation6], %s36
      %s39 = sshll.u32 [#allocation5], 4
      %s40 = int_to_ptr.vmem [resolvable:$true] %s39
      %42 = dma.hbm_to_vmem [thread:$0]  %s2, 128, %s40, [#allocation6]
    $region13: #{tpu_custom_call.1} parent=1 // pred_fallthru
      _
    // Predicated region
    $region14: #{tpu_custom_call.1} parent=1 // pred_check
      _
    $region15: #{tpu_custom_call.1} parent=1 // pred_check_branch
      %44 = sbr.rel (0) target = $region17
    $region16: #{tpu_custom_call.1} parent=1 // pred_region
      _
    $region17: #{tpu_custom_call.1} parent=1 // pred_fallthru
      _
    // Predicated region
    $region18: #{tpu_custom_call.1} parent=1 // pred_check
      _
    $region19: #{tpu_custom_call.1} parent=1 // pred_check_branch
      %46 = sbr.rel (0) target = $region21
    $region20: #{tpu_custom_call.1} parent=1 // pred_region
      %s48 = ssub.s32 512, 512
      %49 = vsyncadd [#allocation6], %s48
      %s50 = sshll.u32 [#allocation7], 4
      %s51 = int_to_ptr.vmem [resolvable:$true] %s50
      %56 = dma.hbm_to_vmem [thread:$0]  %s4, 512, %s51, [#allocation6], 128, 128, 8
    $region21: #{tpu_custom_call.1} parent=1 // pred_fallthru
      _
    // Predicated region
    $region22: #{tpu_custom_call.1} parent=1 // pred_check
      _
    $region23: #{tpu_custom_call.1} parent=1 // pred_check_branch
      %58 = sbr.rel (0) target = $region25
    $region24: #{tpu_custom_call.1} parent=1 // pred_region
      %s60 = ssub.s32 4096, 4096
      %61 = vsyncadd [#allocation9], %s60
      %s62 = sshll.u32 [#allocation8], 4
      %s63 = int_to_ptr.vmem [resolvable:$true] %s62
      %68 = dma.hbm_to_vmem [thread:$0]  %s5, 4096, %s63, [#allocation9], 128, 128, 8
    $region25: #{tpu_custom_call.1} parent=1 // pred_fallthru
      _
    // Predicated region
    $region26: #{tpu_custom_call.1} parent=1 // pred_check
      _
    $region27: #{tpu_custom_call.1} parent=1 // pred_check_branch
      %70 = sbr.rel (0) target = $region29
    $region28: #{tpu_custom_call.1} parent=1 // pred_region
      _
    $region29: #{tpu_custom_call.1} parent=1 // pred_fallthru
      _
    // Predicated region
    $region30: #{tpu_custom_call.1} parent=1 // pred_check
      _
    $region31: #{tpu_custom_call.1} parent=1 // pred_check_branch
      %72 = sbr.rel (0) target = $region33
    $region32: #{tpu_custom_call.1} parent=1 // pred_region
      %s74 = ssub.s32 128, 128
      %75 = vsyncadd [#allocation9], %s74
      %s77 = sshll.u32 [#allocation10], 4
      %s78 = int_to_ptr.vmem [resolvable:$true] %s77
      %80 = dma.hbm_to_vmem [thread:$0]  %s7, 128, %s78, [#allocation9]
    $region33: #{tpu_custom_call.1} parent=1 // pred_fallthru
      _
    // Predicated region
    $region34: #{tpu_custom_call.1} parent=1 // pred_check
      _
    $region35: #{tpu_custom_call.1} parent=1 // pred_check_branch
      %82 = sbr.rel (0) target = $region37
    $region36: #{tpu_custom_call.1} parent=1 // pred_region
      %s84 = ssub.s32 96, 96
      %85 = vsyncadd [#allocation12], %s84
      %s87 = sshll.u32 [#allocation11], 4
      %s88 = int_to_ptr.vmem [resolvable:$true] %s87
      %90 = dma.hbm_to_vmem [thread:$0]  %s8, 96, %s88, [#allocation12]
    $region37: #{tpu_custom_call.1} parent=1 // pred_fallthru
      _
    // Predicated region
    $region38: #{tpu_custom_call.1} parent=1 // pred_check
      _
    $region39: #{tpu_custom_call.1} parent=1 // pred_check_branch
      %92 = sbr.rel (0) target = $region41
    $region40: #{tpu_custom_call.1} parent=1 // pred_region
      _
    $region41: #{tpu_custom_call.1} parent=1 // pred_fallthru
      _
    // Predicated region
    $region42: #{tpu_custom_call.1} parent=1 // pred_check
      _
    $region43: #{tpu_custom_call.1} parent=1 // pred_check_branch
      %94 = sbr.rel (0) target = $region45
    $region44: #{tpu_custom_call.1} parent=1 // pred_region
      _
    $region45: #{tpu_custom_call.1} parent=1 // pred_fallthru
      _
    // Predicated region
    $region46: #{tpu_custom_call.1} parent=1 // pred_check
      _
    $region47: #{tpu_custom_call.1} parent=1 // pred_check_branch
      %96 = sbr.rel (0) target = $region49
    $region48: #{tpu_custom_call.1} parent=1 // pred_region
      %97 = dma.done [#allocation3], 64
    $region49: #{tpu_custom_call.1} parent=1 // pred_fallthru
      _
    // Predicated region
    $region50: #{tpu_custom_call.1} parent=1 // pred_check
      _
    $region51: #{tpu_custom_call.1} parent=1 // pred_check_branch
      %99 = sbr.rel (0) target = $region53
    $region52: #{tpu_custom_call.1} parent=1 // pred_region
      %100 = dma.done [#allocation6], 128
    $region53: #{tpu_custom_call.1} parent=1 // pred_fallthru
      _
    // Predicated region
    $region54: #{tpu_custom_call.1} parent=1 // pred_check
      _
    $region55: #{tpu_custom_call.1} parent=1 // pred_check_branch
      %102 = sbr.rel (0) target = $region57
    $region56: #{tpu_custom_call.1} parent=1 // pred_region
      %103 = dma.done [#allocation6], 512
    $region57: #{tpu_custom_call.1} parent=1 // pred_fallthru
      _
    // Predicated region
    $region58: #{tpu_custom_call.1} parent=1 // pred_check
      _
    $region59: #{tpu_custom_call.1} parent=1 // pred_check_branch
      %105 = sbr.rel (0) target = $region61
    $region60: #{tpu_custom_call.1} parent=1 // pred_region
      %106 = dma.done [#allocation9], 4096
    $region61: #{tpu_custom_call.1} parent=1 // pred_fallthru
      _
    // Predicated region
    $region62: #{tpu_custom_call.1} parent=1 // pred_check
      _
    $region63: #{tpu_custom_call.1} parent=1 // pred_check_branch
      %108 = sbr.rel (0) target = $region65
    $region64: #{tpu_custom_call.1} parent=1 // pred_region
      %109 = dma.done [#allocation9], 128
    $region65: #{tpu_custom_call.1} parent=1 // pred_fallthru
      _
    // Predicated region
    $region66: #{tpu_custom_call.1} parent=1 // pred_check
      _
    $region67: #{tpu_custom_call.1} parent=1 // pred_check_branch
      %111 = sbr.rel (0) target = $region69
    $region68: #{tpu_custom_call.1} parent=1 // pred_region
      %112 = dma.done [#allocation12], 96
    $region69: #{tpu_custom_call.1} parent=1 // pred_fallthru
      _
    %v114 = vld [vmem:[#allocation5] sm:$0x3f]
    %v115 = vld [vmem:[%s0] sm:$0xff]
    %v116 = vld [vmem:[%s0 + $0x8] sm:$0xff]
    %v117 = vld [vmem:[%s0 + $0x10] sm:$0xff]
    %v118 = vld [vmem:[%s0 + $0x18] sm:$0xff]
    %v119 = vld [vmem:[%s0 + $0x20] sm:$0xff]
    %v120 = vld [vmem:[%s0 + $0x28] sm:$0xff]
    %v121 = vld [vmem:[%s0 + $0x30] sm:$0xff]
    %v122 = vld [vmem:[%s0 + $0x38] sm:$0xff]
    %vm123 = vcmask 261120
    %v124 = vsel %vm123, %v115, 0.0
    %125 = vadd.xlane.f32.xlu0 %v124
    %v126 = vpop.xlane.xlu0 %125
    %v127 = vsel %vm123, %v116, 0.0
    %128 = vadd.xlane.f32.xlu0 %v127
    %v129 = vpop.xlane.xlu0 %128
    %v130 = vsel %vm123, %v117, 0.0
    %131 = vadd.xlane.f32.xlu0 %v130
    %v132 = vpop.xlane.xlu0 %131
    %v133 = vsel %vm123, %v118, 0.0
    %134 = vadd.xlane.f32.xlu0 %v133
    %v135 = vpop.xlane.xlu0 %134
    %v136 = vsel %vm123, %v119, 0.0
    %137 = vadd.xlane.f32.xlu0 %v136
    %v138 = vpop.xlane.xlu0 %137
    %v139 = vsel %vm123, %v120, 0.0
    %140 = vadd.xlane.f32.xlu0 %v139
    %v141 = vpop.xlane.xlu0 %140
    %v142 = vsel %vm123, %v121, 0.0
    %143 = vadd.xlane.f32.xlu0 %v142
    %v144 = vpop.xlane.xlu0 %143
    %v145 = vsel %vm123, %v122, 0.0
    %146 = vadd.xlane.f32.xlu0 %v145
    %v147 = vpop.xlane.xlu0 %146
    %v148 = vrcp.pop 32.0
    %v149 = vmul.f32 %v126, %v148
    %v150 = vmul.f32 %v129, %v148
    %v151 = vmul.f32 %v132, %v148
    %v152 = vmul.f32 %v135, %v148
    %v153 = vmul.f32 %v138, %v148
    %v154 = vmul.f32 %v141, %v148
    %v155 = vmul.f32 %v144, %v148
    %v156 = vmul.f32 %v147, %v148
    %v157 = vsub.f32 %v115, %v149
    %v158 = vsub.f32 %v116, %v150
    %v159 = vsub.f32 %v117, %v151
    %v160 = vsub.f32 %v118, %v152
    %v161 = vsub.f32 %v119, %v153
    %v162 = vsub.f32 %v120, %v154
    %v163 = vsub.f32 %v121, %v155
    %v164 = vsub.f32 %v122, %v156
    %v165 = vmul.f32 %v157, %v157
    %v166 = vmul.f32 %v158, %v158
    %v167 = vmul.f32 %v159, %v159
    %v168 = vmul.f32 %v160, %v160
    %v169 = vmul.f32 %v161, %v161
    %v170 = vmul.f32 %v162, %v162
    %v171 = vmul.f32 %v163, %v163
    %v172 = vmul.f32 %v164, %v164
    %v173 = vsel %vm123, %v165, 0.0
    %174 = vadd.xlane.f32.xlu0 %v173
    %v175 = vpop.xlane.xlu0 %174
    %v176 = vsel %vm123, %v166, 0.0
    %177 = vadd.xlane.f32.xlu0 %v176
    %v178 = vpop.xlane.xlu0 %177
    %v179 = vsel %vm123, %v167, 0.0
    %180 = vadd.xlane.f32.xlu0 %v179
    %v181 = vpop.xlane.xlu0 %180
    %v182 = vsel %vm123, %v168, 0.0
    %183 = vadd.xlane.f32.xlu0 %v182
    %v184 = vpop.xlane.xlu0 %183
    %v185 = vsel %vm123, %v169, 0.0
    %186 = vadd.xlane.f32.xlu0 %v185
    %v187 = vpop.xlane.xlu0 %186
    %v188 = vsel %vm123, %v170, 0.0
    %189 = vadd.xlane.f32.xlu0 %v188
    %v190 = vpop.xlane.xlu0 %189
    %v191 = vsel %vm123, %v171, 0.0
    %192 = vadd.xlane.f32.xlu0 %v191
    %v193 = vpop.xlane.xlu0 %192
    %v194 = vsel %vm123, %v172, 0.0
    %195 = vadd.xlane.f32.xlu0 %v194
    %v196 = vpop.xlane.xlu0 %195
    %v197 = vmul.f32 %v175, %v148
    %v198 = vmul.f32 %v178, %v148
    %v199 = vmul.f32 %v181, %v148
    %v200 = vmul.f32 %v184, %v148
    %v201 = vmul.f32 %v187, %v148
    %v202 = vmul.f32 %v190, %v148
    %v203 = vmul.f32 %v193, %v148
    %v204 = vmul.f32 %v196, %v148
    %v205 = vadd.f32 %v197, 1e-05
    %v206 = vadd.f32 %v198, 1e-05
    %v207 = vadd.f32 %v199, 1e-05
    %v208 = vadd.f32 %v200, 1e-05
    %v209 = vadd.f32 %v201, 1e-05
    %v210 = vadd.f32 %v202, 1e-05
    %v211 = vadd.f32 %v203, 1e-05
    %v212 = vadd.f32 %v204, 1e-05
    %v213 = vrsqrt.pop %v205
    %v214 = vrsqrt.pop %v206
    %v215 = vrsqrt.pop %v207
    %v216 = vrsqrt.pop %v208
    %v217 = vrsqrt.pop %v209
    %v218 = vrsqrt.pop %v210
    %v219 = vrsqrt.pop %v211
    %v220 = vrsqrt.pop %v212
    %v221 = vmul.f32 %v157, %v213
    %v222 = vmul.f32 %v158, %v214
    %v223 = vmul.f32 %v159, %v215
    %v224 = vmul.f32 %v160, %v216
    %v225 = vmul.f32 %v161, %v217
    %v226 = vmul.f32 %v162, %v218
    %v227 = vmul.f32 %v163, %v219
    %v228 = vmul.f32 %v164, %v220
    %v229 = vlaneseq
    %v230 = vshrl.u32 %v229, 7
    %v231 = vsub.s32 0, %v230
    %v232 = vrot.slane %v114, %v231
    %v233 = vmul.f32 %v221, %v232
    %v234 = vmul.f32 %v222, %v232
    %v235 = vmul.f32 %v223, %v232
    %v236 = vmul.f32 %v224, %v232
    %v237 = vmul.f32 %v225, %v232
    %v238 = vmul.f32 %v226, %v232
    %v239 = vmul.f32 %v227, %v232
    %v240 = vmul.f32 %v228, %v232
    %v241 = vlaneseq
    %v242 = vshrl.u32 %v241, 7
    %v243 = vsub.s32 1, %v242
    %v244 = vrot.slane %v114, %v243
    %v245 = vadd.f32 %v233, %v244
    %v246 = vadd.f32 %v234, %v244
    %v247 = vadd.f32 %v235, %v244
    %v248 = vadd.f32 %v236, %v244
    %v249 = vadd.f32 %v237, %v244
    %v250 = vadd.f32 %v238, %v244
    %v251 = vadd.f32 %v239, %v244
    %v252 = vadd.f32 %v240, %v244
    %v253 = vld [vmem:[#allocation2] sm:$0xf]
    %vm254 = vcmask 257024
    %v255 = vsel %vm254, %v253, 0.0
    %256 = vadd.xlane.f32.xlu0 %v255
    %v257 = vpop.xlane.xlu0 %256
    %v258 = vmul.f32 %v257, %v148
    %v259 = vsub.f32 %v253, %v258
    %v260 = vmul.f32 %v259, %v259
    %v261 = vsel %vm254, %v260, 0.0
    %262 = vadd.xlane.f32.xlu0 %v261
    %v263 = vpop.xlane.xlu0 %262
    %v264 = vmul.f32 %v263, %v148
    %v265 = vadd.f32 %v264, 1e-05
    %v266 = vrsqrt.pop %v265
    %v267 = vmul.f32 %v259, %v266
    %v268 = vlaneseq
    %v269 = vshrl.u32 %v268, 7
    %v270 = vsub.s32 2, %v269
    %v271 = vrot.slane %v114, %v270
    %v272 = vmul.f32 %v267, %v271
    %v273 = vlaneseq
    %v274 = vshrl.u32 %v273, 7
    %v275 = vsub.s32 3, %v274
    %v276 = vrot.slane %v114, %v275
    %v277 = vadd.f32 %v272, %v276
    %v279 = vsel %vm123, %v245, 0
    %v282 = vsel %vm123, %v246, 0
    %v285 = vsel %vm123, %v247, 0
    %v288 = vsel %vm123, %v248, 0
    %v291 = vsel %vm123, %v249, 0
    %v294 = vsel %vm123, %v250, 0
    %v297 = vsel %vm123, %v251, 0
    %v300 = vsel %vm123, %v252, 0
    %v303 = vsel %vm123, %v277, 0
    %305 = vmatprep.subr.mxu0 0.0
    %306 = vmatpush1.xpose.msra.mxu0 0.0
    %307 = vmatprep.subr.mxu0 0.0
    %308 = vmatpush1.xpose.msra.mxu0 0.0
    %309 = vmatprep.subr.mxu0 0.0
    %310 = vmatpush1.xpose.msra.mxu0 0.0
    %311 = vmatprep.subr.mxu0 0.0
    %312 = vmatpush1.xpose.msra.mxu0 0.0
    %313 = vmatprep.subr.mxu0 0.0
    %314 = vmatpush1.xpose.msra.mxu0 0.0
    %315 = vmatprep.subr.mxu0 0.0
    %316 = vmatpush1.xpose.msra.mxu0 0.0
    %317 = vmatprep.subr.mxu0 0.0
    %318 = vmatpush1.xpose.msra.mxu0 0.0
    %319 = vmatprep.subr.mxu0 0.0
    %320 = vmatpush1.xpose.msra.mxu0 0.0
    %321 = vmatprep.subr.mxu0 0.0
    %322 = vmatpush1.xpose.msra.mxu0 0.0
    %323 = vmatprep.subr.mxu0 0.0
    %324 = vmatpush1.xpose.msra.mxu0 0.0
    %325 = vmatprep.subr.mxu0 0.0
    %326 = vmatpush1.xpose.msra.mxu0 0.0
    %327 = vmatprep.subr.mxu0 0.0
    %328 = vmatpush1.xpose.msra.mxu0 0.0
    %329 = vmatprep.subr.mxu0 0.0
    %330 = vmatpush1.xpose.msra.mxu0 0.0
    %331 = vmatprep.subr.mxu0 0.0
    %332 = vmatpush1.xpose.msra.mxu0 0.0
    %333 = vmatprep.subr.mxu0 0.0
    %334 = vmatpush1.xpose.msra.mxu0 0.0
    %335 = vmatprep.subr.mxu0 0.0
    %336 = vmatpush1.xpose.msra.mxu0 %v303
    %337 = vmatprep.subr.mxu0 0.0
    %338 = vmatpush2.xpose.msra.mxu0 0.0
    %339 = vmatprep.subr.mxu0 0.0
    %340 = vmatpush2.xpose.msra.mxu0 0.0
    %341 = vmatprep.subr.mxu0 0.0
    %342 = vmatpush2.xpose.msra.mxu0 0.0
    %343 = vmatprep.subr.mxu0 0.0
    %344 = vmatpush2.xpose.msra.mxu0 0.0
    %345 = vmatprep.subr.mxu0 0.0
    %346 = vmatpush2.xpose.msra.mxu0 0.0
    %347 = vmatprep.subr.mxu0 0.0
    %348 = vmatpush2.xpose.msra.mxu0 0.0
    %349 = vmatprep.subr.mxu0 0.0
    %350 = vmatpush2.xpose.msra.mxu0 0.0
    %351 = vmatprep.subr.mxu0 0.0
    %352 = vmatpush2.xpose.msra.mxu0 0.0
    %353 = vmatprep.subr.mxu0 0.0
    %354 = vmatpush2.xpose.msra.mxu0 0.0
    %355 = vmatprep.subr.mxu0 0.0
    %356 = vmatpush2.xpose.msra.mxu0 0.0
    %357 = vmatprep.subr.mxu0 0.0
    %358 = vmatpush2.xpose.msra.mxu0 0.0
    %359 = vmatprep.subr.mxu0 0.0
    %360 = vmatpush2.xpose.msra.mxu0 0.0
    %361 = vmatprep.subr.mxu0 0.0
    %362 = vmatpush2.xpose.msra.mxu0 0.0
    %363 = vmatprep.subr.mxu0 0.0
    %364 = vmatpush2.xpose.msra.mxu0 0.0
    %365 = vmatprep.subr.mxu0 0.0
    %366 = vmatpush2.xpose.msra.mxu0 0.0
    %367 = vmatprep.subr.mxu0 0.0
    %368 = vmatpush2.xpose.msra.mxu0 0.0
    %369 = vmatprep.mubr.f32.mxu0 0.0
    %370 = vmatmul.mubr.f32.gmra.mxu0 %v279
    %v371 = vpop.f32.mrf.mxu0
    %v372 = vadd.f32 0.0, %v371
    %v373 = vpop.f32.mrf.mxu0
    %374 = vmatprep.mubr.f32.mxu0 0.0
    %375 = vmatmul.mubr.f32.gmra.mxu0 %v282
    %v376 = vpop.f32.mrf.mxu0
    %v377 = vadd.f32 0.0, %v376
    %v378 = vpop.f32.mrf.mxu0
    %379 = vmatprep.mubr.f32.mxu0 0.0
    %380 = vmatmul.mubr.f32.gmra.mxu0 %v285
    %v381 = vpop.f32.mrf.mxu0
    %v382 = vadd.f32 0.0, %v381
    %v383 = vpop.f32.mrf.mxu0
    %384 = vmatprep.mubr.f32.mxu0 0.0
    %385 = vmatmul.mubr.f32.gmra.mxu0 %v288
    %v386 = vpop.f32.mrf.mxu0
    %v387 = vadd.f32 0.0, %v386
    %v388 = vpop.f32.mrf.mxu0
    %389 = vmatprep.mubr.f32.mxu0 0.0
    %390 = vmatmul.mubr.f32.gmra.mxu0 %v291
    %v391 = vpop.f32.mrf.mxu0
    %v392 = vadd.f32 0.0, %v391
    %v393 = vpop.f32.mrf.mxu0
    %394 = vmatprep.mubr.f32.mxu0 0.0
    %395 = vmatmul.mubr.f32.gmra.mxu0 %v294
    %v396 = vpop.f32.mrf.mxu0
    %v397 = vadd.f32 0.0, %v396
    %v398 = vpop.f32.mrf.mxu0
    %399 = vmatprep.mubr.f32.mxu0 0.0
    %400 = vmatmul.mubr.f32.gmra.mxu0 %v297
    %v401 = vpop.f32.mrf.mxu0
    %v402 = vadd.f32 0.0, %v401
    %v403 = vpop.f32.mrf.mxu0
    %404 = vmatprep.mubr.f32.mxu0 0.0
    %405 = vmatmul.mubr.f32.gmra.mxu0 %v300
    %v406 = vpop.f32.mrf.mxu0
    %v407 = vadd.f32 0.0, %v406
    %v408 = vpop.f32.mrf.mxu0
    %409 = vdwg.mxu0
    %v410 = vrcp.pop 0.7
    %v411 = vmul.f32 %v372, %v410
    %v412 = vmul.f32 %v377, %v410
    %v413 = vmul.f32 %v382, %v410
    %v414 = vmul.f32 %v387, %v410
    %v415 = vmul.f32 %v392, %v410
    %v416 = vmul.f32 %v397, %v410
    %v417 = vmul.f32 %v402, %v410
    %v418 = vmul.f32 %v407, %v410
    %vm419 = vcmask 31744
    %v420 = vsel %vm419, %v411, -inf
    %421 = vmax.xlane.f32.xlu0 %v420
    %v422 = vpop.xlane.xlu0 %421
    %v423 = vsel %vm419, %v412, -inf
    %424 = vmax.xlane.f32.xlu0 %v423
    %v425 = vpop.xlane.xlu0 %424
    %v426 = vsel %vm419, %v413, -inf
    %427 = vmax.xlane.f32.xlu0 %v426
    %v428 = vpop.xlane.xlu0 %427
    %v429 = vsel %vm419, %v414, -inf
    %430 = vmax.xlane.f32.xlu0 %v429
    %v431 = vpop.xlane.xlu0 %430
    %v432 = vsel %vm419, %v415, -inf
    %433 = vmax.xlane.f32.xlu0 %v432
    %v434 = vpop.xlane.xlu0 %433
    %v435 = vsel %vm419, %v416, -inf
    %436 = vmax.xlane.f32.xlu0 %v435
    %v437 = vpop.xlane.xlu0 %436
    %v438 = vsel %vm419, %v417, -inf
    %439 = vmax.xlane.f32.xlu0 %v438
    %v440 = vpop.xlane.xlu0 %439
    %v441 = vsel %vm419, %v418, -inf
    %442 = vmax.xlane.f32.xlu0 %v441
    %v443 = vpop.xlane.xlu0 %442
    %v444 = vsub.f32 %v411, %v422
    %v445 = vsub.f32 %v412, %v425
    %v446 = vsub.f32 %v413, %v428
    %v447 = vsub.f32 %v414, %v431
    %v448 = vsub.f32 %v415, %v434
    %v449 = vsub.f32 %v416, %v437
    %v450 = vsub.f32 %v417, %v440
    %v451 = vsub.f32 %v418, %v443
    %v452 = vmul.f32 %v444, 1.442695
    %v453 = vpow.pop %v452
    %v454 = vmul.f32 %v445, 1.442695
    %v455 = vpow.pop %v454
    %v456 = vmul.f32 %v446, 1.442695
    %v457 = vpow.pop %v456
    %v458 = vmul.f32 %v447, 1.442695
    %v459 = vpow.pop %v458
    %v460 = vmul.f32 %v448, 1.442695
    %v461 = vpow.pop %v460
    %v462 = vmul.f32 %v449, 1.442695
    %v463 = vpow.pop %v462
    %v464 = vmul.f32 %v450, 1.442695
    %v465 = vpow.pop %v464
    %v466 = vmul.f32 %v451, 1.442695
    %v467 = vpow.pop %v466
    %v468 = vsel %vm419, %v453, 0.0
    %469 = vadd.xlane.f32.xlu0 %v468
    %v470 = vpop.xlane.xlu0 %469
    %v471 = vsel %vm419, %v455, 0.0
    %472 = vadd.xlane.f32.xlu0 %v471
    %v473 = vpop.xlane.xlu0 %472
    %v474 = vsel %vm419, %v457, 0.0
    %475 = vadd.xlane.f32.xlu0 %v474
    %v476 = vpop.xlane.xlu0 %475
    %v477 = vsel %vm419, %v459, 0.0
    %478 = vadd.xlane.f32.xlu0 %v477
    %v479 = vpop.xlane.xlu0 %478
    %v480 = vsel %vm419, %v461, 0.0
    %481 = vadd.xlane.f32.xlu0 %v480
    %v482 = vpop.xlane.xlu0 %481
    %v483 = vsel %vm419, %v463, 0.0
    %484 = vadd.xlane.f32.xlu0 %v483
    %v485 = vpop.xlane.xlu0 %484
    %v486 = vsel %vm419, %v465, 0.0
    %487 = vadd.xlane.f32.xlu0 %v486
    %v488 = vpop.xlane.xlu0 %487
    %v489 = vsel %vm419, %v467, 0.0
    %490 = vadd.xlane.f32.xlu0 %v489
    %v491 = vpop.xlane.xlu0 %490
    %v492 = vrcp.pop %v470
    %v493 = vmul.f32 %v453, %v492
    %v494 = vrcp.pop %v473
    %v495 = vmul.f32 %v455, %v494
    %v496 = vrcp.pop %v476
    %v497 = vmul.f32 %v457, %v496
    %v498 = vrcp.pop %v479
    %v499 = vmul.f32 %v459, %v498
    %v500 = vrcp.pop %v482
    %v501 = vmul.f32 %v461, %v500
    %v502 = vrcp.pop %v485
    %v503 = vmul.f32 %v463, %v502
    %v504 = vrcp.pop %v488
    %v505 = vmul.f32 %v465, %v504
    %v506 = vrcp.pop %v491
    %v507 = vmul.f32 %v467, %v506
    %v508 = vpack.c.bf16 %v495, %v493
    %v509 = vpack.c.bf16 %v499, %v497
    %v510 = vpack.c.bf16 %v503, %v501
    %v511 = vpack.c.bf16 %v507, %v505
    %v512 = vld [vmem:[#allocation11] sm:$0x3f]
    %v515 = vunpack.c.l.s4 1983009808
    %v516 = vunpack.c.0.s8 %v515
    %v517 = vlaneseq
    %v518 = vshrl.u32 %v517, 7
    %v519 = vsub.s32 %v516, %v518
    %v520 = vrot.slane %v512, %v519
    %v521 = vcombine.high %v520, %v520
    %v523 = vsel %vm419, %v508, 0
    %v526 = vsel %vm419, %v509, 0
    %v529 = vsel %vm419, %v510, 0
    %v532 = vsel %vm419, %v511, 0
    %vm534 = vcmask 1041408
    %v536 = vsel %vm534, %v520, 0
    %v539 = vsel %vm534, %v521, 0
    %541 = vmatprep.subr.bf16.mxu0 0
    %542 = vmatpush1.bf16.msra.mxu0 0
    %543 = vmatprep.subr.bf16.mxu0 0
    %544 = vmatpush1.bf16.msra.mxu0 0
    %545 = vmatprep.subr.bf16.mxu0 0
    %546 = vmatpush1.bf16.msra.mxu0 0
    %547 = vmatprep.subr.bf16.mxu0 0
    %548 = vmatpush1.bf16.msra.mxu0 0
    %549 = vmatprep.subr.bf16.mxu0 0
    %550 = vmatpush1.bf16.msra.mxu0 0
    %551 = vmatprep.subr.bf16.mxu0 0
    %552 = vmatpush1.bf16.msra.mxu0 0
    %553 = vmatprep.subr.bf16.mxu0 0
    %554 = vmatpush1.bf16.msra.mxu0 0
    %555 = vmatprep.subr.bf16.mxu0 %v539
    %556 = vmatpush1.bf16.msra.mxu0 %v536
    %557 = vmatprep.subr.bf16.mxu0 0
    %558 = vmatpush2.bf16.msra.mxu0 0
    %559 = vmatprep.subr.bf16.mxu0 0
    %560 = vmatpush2.bf16.msra.mxu0 0
    %561 = vmatprep.subr.bf16.mxu0 0
    %562 = vmatpush2.bf16.msra.mxu0 0
    %563 = vmatprep.subr.bf16.mxu0 0
    %564 = vmatpush2.bf16.msra.mxu0 0
    %565 = vmatprep.subr.bf16.mxu0 0
    %566 = vmatpush2.bf16.msra.mxu0 0
    %567 = vmatprep.subr.bf16.mxu0 0
    %568 = vmatpush2.bf16.msra.mxu0 0
    %569 = vmatprep.subr.bf16.mxu0 0
    %570 = vmatpush2.bf16.msra.mxu0 0
    %571 = vmatprep.subr.bf16.mxu0 0
    %572 = vmatpush2.bf16.msra.mxu0 0
    %573 = vmatprep.mubr.bf16.mxu0 0
    %574 = vmatmul.mubr.bf16.gmra.mxu0 %v523
    %v575 = vpop.f32.mrf.mxu0
    %v576 = vadd.f32 0.0, %v575
    %v577 = vpop.f32.mrf.mxu0
    %v578 = vadd.f32 0.0, %v577
    %v579 = vpop.f32.mrf.mxu0
    %v580 = vadd.f32 0.0, %v579
    %v581 = vpop.f32.mrf.mxu0
    %v582 = vadd.f32 0.0, %v581
    %583 = vmatprep.mubr.bf16.mxu0 0
    %584 = vmatmul.mubr.bf16.gmra.mxu0 %v526
    %v585 = vpop.f32.mrf.mxu0
    %v586 = vadd.f32 0.0, %v585
    %v587 = vpop.f32.mrf.mxu0
    %v588 = vadd.f32 0.0, %v587
    %v589 = vpop.f32.mrf.mxu0
    %v590 = vadd.f32 0.0, %v589
    %v591 = vpop.f32.mrf.mxu0
    %v592 = vadd.f32 0.0, %v591
    %593 = vmatprep.mubr.bf16.mxu0 0
    %594 = vmatmul.mubr.bf16.gmra.mxu0 %v529
    %v595 = vpop.f32.mrf.mxu0
    %v596 = vadd.f32 0.0, %v595
    %v597 = vpop.f32.mrf.mxu0
    %v598 = vadd.f32 0.0, %v597
    %v599 = vpop.f32.mrf.mxu0
    %v600 = vadd.f32 0.0, %v599
    %v601 = vpop.f32.mrf.mxu0
    %v602 = vadd.f32 0.0, %v601
    %603 = vmatprep.mubr.bf16.mxu0 0
    %604 = vmatmul.mubr.bf16.gmra.mxu0 %v532
    %v605 = vpop.f32.mrf.mxu0
    %v606 = vadd.f32 0.0, %v605
    %v607 = vpop.f32.mrf.mxu0
    %v608 = vadd.f32 0.0, %v607
    %v609 = vpop.f32.mrf.mxu0
    %v610 = vadd.f32 0.0, %v609
    %v611 = vpop.f32.mrf.mxu0
    %v612 = vadd.f32 0.0, %v611
    %613 = vdwg.mxu0
    %v614 = vcombine.high %v512, %v512
    %v616 = vunpack.c.l.s4 1983009808
    %v617 = vunpack.c.0.s8 %v616
    %v618 = vlaneseq
    %v619 = vshrl.u32 %v618, 7
    %v620 = vsub.s32 %v617, %v619
    %v621 = vrot.slane %v614, %v620
    %v623 = vsel %vm534, %v621, 0
    %625 = vmatprep.subr.bf16.mxu0 0
    %626 = vmatpush1.bf16.msra.mxu0 0
    %627 = vmatprep.subr.bf16.mxu0 0
    %628 = vmatpush1.bf16.msra.mxu0 0
    %629 = vmatprep.subr.bf16.mxu0 0
    %630 = vmatpush1.bf16.msra.mxu0 0
    %631 = vmatprep.subr.bf16.mxu0 0
    %632 = vmatpush1.bf16.msra.mxu0 0
    %633 = vmatprep.subr.bf16.mxu0 0
    %634 = vmatpush1.bf16.msra.mxu0 0
    %635 = vmatprep.subr.bf16.mxu0 0
    %636 = vmatpush1.bf16.msra.mxu0 0
    %637 = vmatprep.subr.bf16.mxu0 0
    %638 = vmatpush1.bf16.msra.mxu0 0
    %639 = vmatprep.subr.bf16.mxu0 0
    %640 = vmatpush1.bf16.msra.mxu0 %v623
    %641 = vmatprep.subr.bf16.mxu0 0
    %642 = vmatpush2.bf16.msra.mxu0 0
    %643 = vmatprep.subr.bf16.mxu0 0
    %644 = vmatpush2.bf16.msra.mxu0 0
    %645 = vmatprep.subr.bf16.mxu0 0
    %646 = vmatpush2.bf16.msra.mxu0 0
    %647 = vmatprep.subr.bf16.mxu0 0
    %648 = vmatpush2.bf16.msra.mxu0 0
    %649 = vmatprep.subr.bf16.mxu0 0
    %650 = vmatpush2.bf16.msra.mxu0 0
    %651 = vmatprep.subr.bf16.mxu0 0
    %652 = vmatpush2.bf16.msra.mxu0 0
    %653 = vmatprep.subr.bf16.mxu0 0
    %654 = vmatpush2.bf16.msra.mxu0 0
    %655 = vmatprep.subr.bf16.mxu0 0
    %656 = vmatpush2.bf16.msra.mxu0 0
    %657 = vmatprep.mubr.bf16.mxu0 0
    %658 = vmatmul.mubr.bf16.gmra.mxu0 %v523
    %v659 = vpop.f32.mrf.mxu0
    %v660 = vadd.f32 0.0, %v659
    %v661 = vpop.f32.mrf.mxu0
    %v662 = vpop.f32.mrf.mxu0
    %v663 = vadd.f32 0.0, %v662
    %v664 = vpop.f32.mrf.mxu0
    %665 = vmatprep.mubr.bf16.mxu0 0
    %666 = vmatmul.mubr.bf16.gmra.mxu0 %v526
    %v667 = vpop.f32.mrf.mxu0
    %v668 = vadd.f32 0.0, %v667
    %v669 = vpop.f32.mrf.mxu0
    %v670 = vpop.f32.mrf.mxu0
    %v671 = vadd.f32 0.0, %v670
    %v672 = vpop.f32.mrf.mxu0
    %673 = vmatprep.mubr.bf16.mxu0 0
    %674 = vmatmul.mubr.bf16.gmra.mxu0 %v529
    %v675 = vpop.f32.mrf.mxu0
    %v676 = vadd.f32 0.0, %v675
    %v677 = vpop.f32.mrf.mxu0
    %v678 = vpop.f32.mrf.mxu0
    %v679 = vadd.f32 0.0, %v678
    %v680 = vpop.f32.mrf.mxu0
    %681 = vmatprep.mubr.bf16.mxu0 0
    %682 = vmatmul.mubr.bf16.gmra.mxu0 %v532
    %v683 = vpop.f32.mrf.mxu0
    %v684 = vadd.f32 0.0, %v683
    %v685 = vpop.f32.mrf.mxu0
    %v686 = vpop.f32.mrf.mxu0
    %v687 = vadd.f32 0.0, %v686
    %v688 = vpop.f32.mrf.mxu0
    %689 = vdwg.mxu0
    %v690 = vld [vmem:[%s3] sm:$0xf]
    %v691 = vld [vmem:[%s3 + $0x4] sm:$0xf]
    %v692 = vld [vmem:[%s3 + $0x8] sm:$0xf]
    %v693 = vld [vmem:[%s3 + $0xc] sm:$0xf]
    %v694 = vld [vmem:[%s3 + $0x10] sm:$0xf]
    %v695 = vld [vmem:[%s3 + $0x14] sm:$0xf]
    %v696 = vld [vmem:[%s3 + $0x18] sm:$0xf]
    %v697 = vld [vmem:[%s3 + $0x1c] sm:$0xf]
    %v698 = vld [vmem:[#allocation10] sm:$0x77]
    %v699 = vpack.c.bf16 %v246, %v245
    %v700 = vpack.c.bf16 %v248, %v247
    %v701 = vpack.c.bf16 %v250, %v249
    %v702 = vpack.c.bf16 %v252, %v251
    %v703 = vld [vmem:[#allocation7] sm:$0xff]
    %v704 = vld [vmem:[#allocation7 + $0x8] sm:$0xff]
    %v705 = vld [vmem:[#allocation7 + $0x10] sm:$0xff]
    %v706 = vld [vmem:[#allocation7 + $0x18] sm:$0xff]
    %v711 = vunpack.c.l.b16 %v703
    %v712 = vunpack.c.h.b16 %v703
    %v713 = vunpack.c.l.b16 %v704
    %v714 = vunpack.c.h.b16 %v704
    %v715 = vunpack.c.l.b16 %v705
    %v716 = vunpack.c.h.b16 %v705
    %v717 = vunpack.c.l.b16 %v706
    %v718 = vunpack.c.h.b16 %v706
    %v719 = vpack.c.b16 %v713, %v711
    %v720 = vpack.c.b16 %v714, %v712
    %v721 = vpack.c.b16 %v717, %v715
    %v722 = vpack.c.b16 %v718, %v716
    %v728 = vsel %vm123, %v699, 0
    %v731 = vsel %vm123, %v700, 0
    %v734 = vsel %vm123, %v701, 0
    %v737 = vsel %vm123, %v702, 0
    %739 = vmatprep.subr.bf16.mxu0 0
    %740 = vmatpush1.bf16.msra.mxu0 0
    %741 = vmatprep.subr.bf16.mxu0 0
    %742 = vmatpush1.bf16.msra.mxu0 0
    %743 = vmatprep.subr.bf16.mxu0 0
    %744 = vmatpush1.bf16.msra.mxu0 0
    %745 = vmatprep.subr.bf16.mxu0 0
    %746 = vmatpush1.bf16.msra.mxu0 0
    %747 = vmatprep.subr.bf16.mxu0 0
    %748 = vmatpush1.bf16.msra.mxu0 0
    %749 = vmatprep.subr.bf16.mxu0 0
    %750 = vmatpush1.bf16.msra.mxu0 0
    %751 = vmatprep.subr.bf16.mxu0 %v722
    %752 = vmatpush1.bf16.msra.mxu0 %v721
    %753 = vmatprep.subr.bf16.mxu0 %v720
    %754 = vmatpush1.bf16.msra.mxu0 %v719
    %755 = vmatprep.subr.bf16.mxu0 0
    %756 = vmatpush2.bf16.msra.mxu0 0
    %757 = vmatprep.subr.bf16.mxu0 0
    %758 = vmatpush2.bf16.msra.mxu0 0
    %759 = vmatprep.subr.bf16.mxu0 0
    %760 = vmatpush2.bf16.msra.mxu0 0
    %761 = vmatprep.subr.bf16.mxu0 0
    %762 = vmatpush2.bf16.msra.mxu0 0
    %763 = vmatprep.subr.bf16.mxu0 0
    %764 = vmatpush2.bf16.msra.mxu0 0
    %765 = vmatprep.subr.bf16.mxu0 0
    %766 = vmatpush2.bf16.msra.mxu0 0
    %767 = vmatprep.subr.bf16.mxu0 0
    %768 = vmatpush2.bf16.msra.mxu0 0
    %769 = vmatprep.subr.bf16.mxu0 0
    %770 = vmatpush2.bf16.msra.mxu0 0
    %771 = vmatprep.mubr.bf16.mxu0 0
    %772 = vmatmul.mubr.bf16.gmra.mxu0 %v728
    %v773 = vpop.f32.mrf.mxu0
    %v774 = vadd.f32 0.0, %v773
    %v775 = vpop.f32.mrf.mxu0
    %v776 = vadd.f32 0.0, %v775
    %v777 = vpop.f32.mrf.mxu0
    %v778 = vadd.f32 0.0, %v777
    %v779 = vpop.f32.mrf.mxu0
    %v780 = vadd.f32 0.0, %v779
    %781 = vmatprep.mubr.bf16.mxu0 0
    %782 = vmatmul.mubr.bf16.gmra.mxu0 %v731
    %v783 = vpop.f32.mrf.mxu0
    %v784 = vadd.f32 0.0, %v783
    %v785 = vpop.f32.mrf.mxu0
    %v786 = vadd.f32 0.0, %v785
    %v787 = vpop.f32.mrf.mxu0
    %v788 = vadd.f32 0.0, %v787
    %v789 = vpop.f32.mrf.mxu0
    %v790 = vadd.f32 0.0, %v789
    %791 = vmatprep.mubr.bf16.mxu0 0
    %792 = vmatmul.mubr.bf16.gmra.mxu0 %v734
    %v793 = vpop.f32.mrf.mxu0
    %v794 = vadd.f32 0.0, %v793
    %v795 = vpop.f32.mrf.mxu0
    %v796 = vadd.f32 0.0, %v795
    %v797 = vpop.f32.mrf.mxu0
    %v798 = vadd.f32 0.0, %v797
    %v799 = vpop.f32.mrf.mxu0
    %v800 = vadd.f32 0.0, %v799
    %801 = vmatprep.mubr.bf16.mxu0 0
    %802 = vmatmul.mubr.bf16.gmra.mxu0 %v737
    %v803 = vpop.f32.mrf.mxu0
    %v804 = vadd.f32 0.0, %v803
    %v805 = vpop.f32.mrf.mxu0
    %v806 = vadd.f32 0.0, %v805
    %v807 = vpop.f32.mrf.mxu0
    %v808 = vadd.f32 0.0, %v807
    %v809 = vpop.f32.mrf.mxu0
    %v810 = vadd.f32 0.0, %v809
    %811 = vdwg.mxu0
    %v812 = vmul.f32 %v774, %v576
    %v813 = vmul.f32 %v776, %v578
    %v814 = vmul.f32 %v778, %v580
    %v815 = vmul.f32 %v780, %v582
    %v816 = vmul.f32 %v784, %v586
    %v817 = vmul.f32 %v786, %v588
    %v818 = vmul.f32 %v788, %v590
    %v819 = vmul.f32 %v790, %v592
    %v820 = vmul.f32 %v794, %v596
    %v821 = vmul.f32 %v796, %v598
    %v822 = vmul.f32 %v798, %v600
    %v823 = vmul.f32 %v800, %v602
    %v824 = vmul.f32 %v804, %v606
    %v825 = vmul.f32 %v806, %v608
    %v826 = vmul.f32 %v808, %v610
    %v827 = vmul.f32 %v810, %v612
    %v828 = vpack.c.bf16 %v814, %v812
    %v829 = vpack.c.bf16 %v815, %v813
    %v830 = vpack.c.bf16 %v818, %v816
    %v831 = vpack.c.bf16 %v819, %v817
    %v832 = vpack.c.bf16 %v822, %v820
    %v833 = vpack.c.bf16 %v823, %v821
    %v834 = vpack.c.bf16 %v826, %v824
    %v835 = vpack.c.bf16 %v827, %v825
    %v837 = vlaneseq
    %v838 = vshrl.u32 %v837, 7
    %v839 = vsub.s32 0, %v838
    %v840 = vrot.slane %v698, %v839
    %v841 = vlaneseq
    %v842 = vshrl.u32 %v841, 7
    %v843 = vsub.s32 4, %v842
    %v844 = vrot.slane %v698, %v843
    %v847 = vlaneseq
    %v848 = vshrl.u32 %v847, 7
    %v849 = vsub.s32 0, %v848
    %v850 = vrot.slane %v840, %v849
    %v851 = vlaneseq
    %v852 = vshrl.u32 %v851, 7
    %v853 = vsub.s32 0, %v852
    %v854 = vrot.slane %v844, %v853
    %v863 = vunpack.c.l.b16 %v690
    %v864 = vunpack.c.l.b16 %v691
    %v865 = vunpack.c.l.b16 %v692
    %v866 = vunpack.c.l.b16 %v693
    %v867 = vunpack.c.l.b16 %v694
    %v868 = vunpack.c.l.b16 %v695
    %v869 = vunpack.c.l.b16 %v696
    %v870 = vunpack.c.l.b16 %v697
    %v871 = vpack.c.b16 %v864, %v863
    %v872 = vpack.c.b16 %v866, %v865
    %v873 = vpack.c.b16 %v868, %v867
    %v874 = vpack.c.b16 %v870, %v869
    %vm875 = vcmask 523264
    %v877 = vsel %vm875, %v871, 0
    %v880 = vsel %vm875, %v872, 0
    %v883 = vsel %vm875, %v873, 0
    %v886 = vsel %vm875, %v874, 0
    %888 = vmatprep.subr.bf16.mxu0 0
    %889 = vmatpush1.bf16.msra.mxu0 0
    %890 = vmatprep.subr.bf16.mxu0 0
    %891 = vmatpush1.bf16.msra.mxu0 0
    %892 = vmatprep.subr.bf16.mxu0 0
    %893 = vmatpush1.bf16.msra.mxu0 0
    %894 = vmatprep.subr.bf16.mxu0 0
    %895 = vmatpush1.bf16.msra.mxu0 0
    %896 = vmatprep.subr.bf16.mxu0 %v835
    %897 = vmatpush1.bf16.msra.mxu0 %v834
    %898 = vmatprep.subr.bf16.mxu0 %v833
    %899 = vmatpush1.bf16.msra.mxu0 %v832
    %900 = vmatprep.subr.bf16.mxu0 %v831
    %901 = vmatpush1.bf16.msra.mxu0 %v830
    %902 = vmatprep.subr.bf16.mxu0 %v829
    %903 = vmatpush1.bf16.msra.mxu0 %v828
    %904 = vmatprep.subr.bf16.mxu0 0
    %905 = vmatpush2.bf16.msra.mxu0 0
    %906 = vmatprep.subr.bf16.mxu0 0
    %907 = vmatpush2.bf16.msra.mxu0 0
    %908 = vmatprep.subr.bf16.mxu0 0
    %909 = vmatpush2.bf16.msra.mxu0 0
    %910 = vmatprep.subr.bf16.mxu0 0
    %911 = vmatpush2.bf16.msra.mxu0 0
    %912 = vmatprep.subr.bf16.mxu0 0
    %913 = vmatpush2.bf16.msra.mxu0 0
    %914 = vmatprep.subr.bf16.mxu0 0
    %915 = vmatpush2.bf16.msra.mxu0 0
    %916 = vmatprep.subr.bf16.mxu0 0
    %917 = vmatpush2.bf16.msra.mxu0 0
    %918 = vmatprep.subr.bf16.mxu0 0
    %919 = vmatpush2.bf16.msra.mxu0 0
    %920 = vmatprep.mubr.bf16.mxu0 0
    %921 = vmatmul.mubr.bf16.gmra.mxu0 %v877
    %v922 = vpop.f32.mrf.mxu0
    %v923 = vadd.f32 %v850, %v922
    %v924 = vpop.f32.mrf.mxu0
    %v925 = vadd.f32 %v854, %v924
    %v926 = vpop.f32.mrf.mxu0
    %v927 = vadd.f32 %v850, %v926
    %v928 = vpop.f32.mrf.mxu0
    %v929 = vadd.f32 %v854, %v928
    %930 = vmatprep.mubr.bf16.mxu0 0
    %931 = vmatmul.mubr.bf16.gmra.mxu0 %v880
    %v932 = vpop.f32.mrf.mxu0
    %v933 = vadd.f32 %v850, %v932
    %v934 = vpop.f32.mrf.mxu0
    %v935 = vadd.f32 %v854, %v934
    %v936 = vpop.f32.mrf.mxu0
    %v937 = vadd.f32 %v850, %v936
    %v938 = vpop.f32.mrf.mxu0
    %v939 = vadd.f32 %v854, %v938
    %940 = vmatprep.mubr.bf16.mxu0 0
    %941 = vmatmul.mubr.bf16.gmra.mxu0 %v883
    %v942 = vpop.f32.mrf.mxu0
    %v943 = vadd.f32 %v850, %v942
    %v944 = vpop.f32.mrf.mxu0
    %v945 = vadd.f32 %v854, %v944
    %v946 = vpop.f32.mrf.mxu0
    %v947 = vadd.f32 %v850, %v946
    %v948 = vpop.f32.mrf.mxu0
    %v949 = vadd.f32 %v854, %v948
    %950 = vmatprep.mubr.bf16.mxu0 0
    %951 = vmatmul.mubr.bf16.gmra.mxu0 %v886
    %v952 = vpop.f32.mrf.mxu0
    %v953 = vadd.f32 %v850, %v952
    %v954 = vpop.f32.mrf.mxu0
    %v955 = vadd.f32 %v854, %v954
    %v956 = vpop.f32.mrf.mxu0
    %v957 = vadd.f32 %v850, %v956
    %v958 = vpop.f32.mrf.mxu0
    %v959 = vadd.f32 %v854, %v958
    %960 = vdwg.mxu0
    %v961 = vmax.f32 %v923, 0.0
    %v962 = vmax.f32 %v925, 0.0
    %v963 = vmax.f32 %v927, 0.0
    %v964 = vmax.f32 %v929, 0.0
    %v965 = vmax.f32 %v933, 0.0
    %v966 = vmax.f32 %v935, 0.0
    %v967 = vmax.f32 %v937, 0.0
    %v968 = vmax.f32 %v939, 0.0
    %v969 = vmax.f32 %v943, 0.0
    %v970 = vmax.f32 %v945, 0.0
    %v971 = vmax.f32 %v947, 0.0
    %v972 = vmax.f32 %v949, 0.0
    %v973 = vmax.f32 %v953, 0.0
    %v974 = vmax.f32 %v955, 0.0
    %v975 = vmax.f32 %v957, 0.0
    %v976 = vmax.f32 %v959, 0.0
    %v977 = vpack.c.bf16 %v963, %v961
    %v978 = vpack.c.bf16 %v964, %v962
    %v979 = vpack.c.bf16 %v967, %v965
    %v980 = vpack.c.bf16 %v968, %v966
    %v981 = vpack.c.bf16 %v971, %v969
    %v982 = vpack.c.bf16 %v972, %v970
    %v983 = vpack.c.bf16 %v975, %v973
    %v984 = vpack.c.bf16 %v976, %v974
    %v985 = vld [vmem:[#allocation8] sm:$0xff]
    %v986 = vld [vmem:[#allocation8 + $0x8] sm:$0xff]
    %v987 = vld [vmem:[#allocation8 + $0x10] sm:$0xff]
    %v988 = vld [vmem:[#allocation8 + $0x18] sm:$0xff]
    %v989 = vld [vmem:[#allocation8 + $0x20] sm:$0xff]
    %v990 = vld [vmem:[#allocation8 + $0x28] sm:$0xff]
    %v991 = vld [vmem:[#allocation8 + $0x30] sm:$0xff]
    %v992 = vld [vmem:[#allocation8 + $0x38] sm:$0xff]
    %v993 = vld [vmem:[#allocation8 + $0x40] sm:$0xff]
    %v994 = vld [vmem:[#allocation8 + $0x48] sm:$0xff]
    %v995 = vld [vmem:[#allocation8 + $0x50] sm:$0xff]
    %v996 = vld [vmem:[#allocation8 + $0x58] sm:$0xff]
    %v997 = vld [vmem:[#allocation8 + $0x60] sm:$0xff]
    %v998 = vld [vmem:[#allocation8 + $0x68] sm:$0xff]
    %v999 = vld [vmem:[#allocation8 + $0x70] sm:$0xff]
    %v1000 = vld [vmem:[#allocation8 + $0x78] sm:$0xff]
    %v1001 = vld [vmem:[#allocation8 + $0x80] sm:$0xff]
    %v1002 = vld [vmem:[#allocation8 + $0x88] sm:$0xff]
    %v1003 = vld [vmem:[#allocation8 + $0x90] sm:$0xff]
    %v1004 = vld [vmem:[#allocation8 + $0x98] sm:$0xff]
    %v1005 = vld [vmem:[#allocation8 + $0xa0] sm:$0xff]
    %v1006 = vld [vmem:[#allocation8 + $0xa8] sm:$0xff]
    %v1007 = vld [vmem:[#allocation8 + $0xb0] sm:$0xff]
    %v1008 = vld [vmem:[#allocation8 + $0xb8] sm:$0xff]
    %v1009 = vld [vmem:[#allocation8 + $0xc0] sm:$0xff]
    %v1010 = vld [vmem:[#allocation8 + $0xc8] sm:$0xff]
    %v1011 = vld [vmem:[#allocation8 + $0xd0] sm:$0xff]
    %v1012 = vld [vmem:[#allocation8 + $0xd8] sm:$0xff]
    %v1013 = vld [vmem:[#allocation8 + $0xe0] sm:$0xff]
    %v1014 = vld [vmem:[#allocation8 + $0xe8] sm:$0xff]
    %v1015 = vld [vmem:[#allocation8 + $0xf0] sm:$0xff]
    %v1016 = vld [vmem:[#allocation8 + $0xf8] sm:$0xff]
    %v1049 = vunpack.c.l.b16 %v985
    %v1050 = vunpack.c.h.b16 %v985
    %v1051 = vunpack.c.l.b16 %v986
    %v1052 = vunpack.c.h.b16 %v986
    %v1053 = vunpack.c.l.b16 %v987
    %v1054 = vunpack.c.h.b16 %v987
    %v1055 = vunpack.c.l.b16 %v988
    %v1056 = vunpack.c.h.b16 %v988
    %v1057 = vunpack.c.l.b16 %v989
    %v1058 = vunpack.c.h.b16 %v989
    %v1059 = vunpack.c.l.b16 %v990
    %v1060 = vunpack.c.h.b16 %v990
    %v1061 = vunpack.c.l.b16 %v991
    %v1062 = vunpack.c.h.b16 %v991
    %v1063 = vunpack.c.l.b16 %v992
    %v1064 = vunpack.c.h.b16 %v992
    %v1065 = vunpack.c.l.b16 %v993
    %v1066 = vunpack.c.h.b16 %v993
    %v1067 = vunpack.c.l.b16 %v994
    %v1068 = vunpack.c.h.b16 %v994
    %v1069 = vunpack.c.l.b16 %v995
    %v1070 = vunpack.c.h.b16 %v995
    %v1071 = vunpack.c.l.b16 %v996
    %v1072 = vunpack.c.h.b16 %v996
    %v1073 = vunpack.c.l.b16 %v997
    %v1074 = vunpack.c.h.b16 %v997
    %v1075 = vunpack.c.l.b16 %v998
    %v1076 = vunpack.c.h.b16 %v998
    %v1077 = vunpack.c.l.b16 %v999
    %v1078 = vunpack.c.h.b16 %v999
    %v1079 = vunpack.c.l.b16 %v1000
    %v1080 = vunpack.c.h.b16 %v1000
    %v1081 = vunpack.c.l.b16 %v1001
    %v1082 = vunpack.c.h.b16 %v1001
    %v1083 = vunpack.c.l.b16 %v1002
    %v1084 = vunpack.c.h.b16 %v1002
    %v1085 = vunpack.c.l.b16 %v1003
    %v1086 = vunpack.c.h.b16 %v1003
    %v1087 = vunpack.c.l.b16 %v1004
    %v1088 = vunpack.c.h.b16 %v1004
    %v1089 = vunpack.c.l.b16 %v1005
    %v1090 = vunpack.c.h.b16 %v1005
    %v1091 = vunpack.c.l.b16 %v1006
    %v1092 = vunpack.c.h.b16 %v1006
    %v1093 = vunpack.c.l.b16 %v1007
    %v1094 = vunpack.c.h.b16 %v1007
    %v1095 = vunpack.c.l.b16 %v1008
    %v1096 = vunpack.c.h.b16 %v1008
    %v1097 = vunpack.c.l.b16 %v1009
    %v1098 = vunpack.c.h.b16 %v1009
    %v1099 = vunpack.c.l.b16 %v1010
    %v1100 = vunpack.c.h.b16 %v1010
    %v1101 = vunpack.c.l.b16 %v1011
    %v1102 = vunpack.c.h.b16 %v1011
    %v1103 = vunpack.c.l.b16 %v1012
    %v1104 = vunpack.c.h.b16 %v1012
    %v1105 = vunpack.c.l.b16 %v1013
    %v1106 = vunpack.c.h.b16 %v1013
    %v1107 = vunpack.c.l.b16 %v1014
    %v1108 = vunpack.c.h.b16 %v1014
    %v1109 = vunpack.c.l.b16 %v1015
    %v1110 = vunpack.c.h.b16 %v1015
    %v1111 = vunpack.c.l.b16 %v1016
    %v1112 = vunpack.c.h.b16 %v1016
    %v1113 = vpack.c.b16 %v1051, %v1049
    %v1114 = vpack.c.b16 %v1052, %v1050
    %v1115 = vpack.c.b16 %v1055, %v1053
    %v1116 = vpack.c.b16 %v1056, %v1054
    %v1117 = vpack.c.b16 %v1059, %v1057
    %v1118 = vpack.c.b16 %v1060, %v1058
    %v1119 = vpack.c.b16 %v1063, %v1061
    %v1120 = vpack.c.b16 %v1064, %v1062
    %v1121 = vpack.c.b16 %v1067, %v1065
    %v1122 = vpack.c.b16 %v1068, %v1066
    %v1123 = vpack.c.b16 %v1071, %v1069
    %v1124 = vpack.c.b16 %v1072, %v1070
    %v1125 = vpack.c.b16 %v1075, %v1073
    %v1126 = vpack.c.b16 %v1076, %v1074
    %v1127 = vpack.c.b16 %v1079, %v1077
    %v1128 = vpack.c.b16 %v1080, %v1078
    %v1129 = vpack.c.b16 %v1083, %v1081
    %v1130 = vpack.c.b16 %v1084, %v1082
    %v1131 = vpack.c.b16 %v1087, %v1085
    %v1132 = vpack.c.b16 %v1088, %v1086
    %v1133 = vpack.c.b16 %v1091, %v1089
    %v1134 = vpack.c.b16 %v1092, %v1090
    %v1135 = vpack.c.b16 %v1095, %v1093
    %v1136 = vpack.c.b16 %v1096, %v1094
    %v1137 = vpack.c.b16 %v1099, %v1097
    %v1138 = vpack.c.b16 %v1100, %v1098
    %v1139 = vpack.c.b16 %v1103, %v1101
    %v1140 = vpack.c.b16 %v1104, %v1102
    %v1141 = vpack.c.b16 %v1107, %v1105
    %v1142 = vpack.c.b16 %v1108, %v1106
    %v1143 = vpack.c.b16 %v1111, %v1109
    %v1144 = vpack.c.b16 %v1112, %v1110
    %1177 = vmatprep.subr.bf16.mxu0 %v1128
    %1178 = vmatpush1.bf16.msra.mxu0 %v1127
    %1179 = vmatprep.subr.bf16.mxu0 %v1126
    %1180 = vmatpush1.bf16.msra.mxu0 %v1125
    %1181 = vmatprep.subr.bf16.mxu0 %v1124
    %1182 = vmatpush1.bf16.msra.mxu0 %v1123
    %1183 = vmatprep.subr.bf16.mxu0 %v1122
    %1184 = vmatpush1.bf16.msra.mxu0 %v1121
    %1185 = vmatprep.subr.bf16.mxu0 %v1120
    %1186 = vmatpush1.bf16.msra.mxu0 %v1119
    %1187 = vmatprep.subr.bf16.mxu0 %v1118
    %1188 = vmatpush1.bf16.msra.mxu0 %v1117
    %1189 = vmatprep.subr.bf16.mxu0 %v1116
    %1190 = vmatpush1.bf16.msra.mxu0 %v1115
    %1191 = vmatprep.subr.bf16.mxu0 %v1114
    %1192 = vmatpush1.bf16.msra.mxu0 %v1113
    %1193 = vmatprep.subr.bf16.mxu0 %v1144
    %1194 = vmatpush2.bf16.msra.mxu0 %v1143
    %1195 = vmatprep.subr.bf16.mxu0 %v1142
    %1196 = vmatpush2.bf16.msra.mxu0 %v1141
    %1197 = vmatprep.subr.bf16.mxu0 %v1140
    %1198 = vmatpush2.bf16.msra.mxu0 %v1139
    %1199 = vmatprep.subr.bf16.mxu0 %v1138
    %1200 = vmatpush2.bf16.msra.mxu0 %v1137
    %1201 = vmatprep.subr.bf16.mxu0 %v1136
    %1202 = vmatpush2.bf16.msra.mxu0 %v1135
    %1203 = vmatprep.subr.bf16.mxu0 %v1134
    %1204 = vmatpush2.bf16.msra.mxu0 %v1133
    %1205 = vmatprep.subr.bf16.mxu0 %v1132
    %1206 = vmatpush2.bf16.msra.mxu0 %v1131
    %1207 = vmatprep.subr.bf16.mxu0 %v1130
    %1208 = vmatpush2.bf16.msra.mxu0 %v1129
    %1209 = vmatprep.mubr.bf16.mxu0 %v978
    %1210 = vmatmul.mubr.bf16.gmra.mxu0 %v977
    %v1211 = vpop.f32.mrf.mxu0
    %v1212 = vadd.f32 0.0, %v1211
    %v1213 = vpop.f32.mrf.mxu0
    %v1214 = vadd.f32 0.0, %v1213
    %v1215 = vpop.f32.mrf.mxu0
    %v1216 = vadd.f32 0.0, %v1215
    %v1217 = vpop.f32.mrf.mxu0
    %v1218 = vadd.f32 0.0, %v1217
    %1219 = vmatprep.mubr.bf16.mxu0 %v980
    %1220 = vmatmul.mubr.bf16.gmra.mxu0 %v979
    %v1221 = vpop.f32.mrf.mxu0
    %v1222 = vadd.f32 0.0, %v1221
    %v1223 = vpop.f32.mrf.mxu0
    %v1224 = vadd.f32 0.0, %v1223
    %v1225 = vpop.f32.mrf.mxu0
    %v1226 = vadd.f32 0.0, %v1225
    %v1227 = vpop.f32.mrf.mxu0
    %v1228 = vadd.f32 0.0, %v1227
    %1229 = vmatprep.mubr.bf16.mxu0 %v982
    %1230 = vmatmul.mubr.bf16.gmra.mxu0 %v981
    %v1231 = vpop.f32.mrf.mxu0
    %v1232 = vadd.f32 0.0, %v1231
    %v1233 = vpop.f32.mrf.mxu0
    %v1234 = vadd.f32 0.0, %v1233
    %v1235 = vpop.f32.mrf.mxu0
    %v1236 = vadd.f32 0.0, %v1235
    %v1237 = vpop.f32.mrf.mxu0
    %v1238 = vadd.f32 0.0, %v1237
    %1239 = vmatprep.mubr.bf16.mxu0 %v984
    %1240 = vmatmul.mubr.bf16.gmra.mxu0 %v983
    %v1241 = vpop.f32.mrf.mxu0
    %v1242 = vadd.f32 0.0, %v1241
    %v1243 = vpop.f32.mrf.mxu0
    %v1244 = vadd.f32 0.0, %v1243
    %v1245 = vpop.f32.mrf.mxu0
    %v1246 = vadd.f32 0.0, %v1245
    %v1247 = vpop.f32.mrf.mxu0
    %v1248 = vadd.f32 0.0, %v1247
    %1249 = vdwg.mxu0
    %v1250 = vpack.c.bf16 %v1216, %v1212
    %v1251 = vpack.c.bf16 %v1218, %v1214
    %v1252 = vpack.c.bf16 %v1226, %v1222
    %v1253 = vpack.c.bf16 %v1228, %v1224
    %v1254 = vpack.c.bf16 %v1236, %v1232
    %v1255 = vpack.c.bf16 %v1238, %v1234
    %v1256 = vpack.c.bf16 %v1246, %v1242
    %v1257 = vpack.c.bf16 %v1248, %v1244
    %v1258 = vlaneseq
    %v1259 = vshrl.u32 %v1258, 7
    %v1260 = vsub.s32 1, %v1259
    %v1261 = vrot.slane %v698, %v1260
    %v1262 = vlaneseq
    %v1263 = vshrl.u32 %v1262, 7
    %v1264 = vsub.s32 5, %v1263
    %v1265 = vrot.slane %v698, %v1264
    %v1268 = vlaneseq
    %v1269 = vshrl.u32 %v1268, 7
    %v1270 = vsub.s32 1, %v1269
    %v1271 = vrot.slane %v1261, %v1270
    %v1272 = vlaneseq
    %v1273 = vshrl.u32 %v1272, 7
    %v1274 = vsub.s32 1, %v1273
    %v1275 = vrot.slane %v1265, %v1274
    %1276 = vmatprep.subr.bf16.mxu0 0
    %1277 = vmatpush1.bf16.msra.mxu0 0
    %1278 = vmatprep.subr.bf16.mxu0 0
    %1279 = vmatpush1.bf16.msra.mxu0 0
    %1280 = vmatprep.subr.bf16.mxu0 0
    %1281 = vmatpush1.bf16.msra.mxu0 0
    %1282 = vmatprep.subr.bf16.mxu0 0
    %1283 = vmatpush1.bf16.msra.mxu0 0
    %1284 = vmatprep.subr.bf16.mxu0 %v1257
    %1285 = vmatpush1.bf16.msra.mxu0 %v1256
    %1286 = vmatprep.subr.bf16.mxu0 %v1255
    %1287 = vmatpush1.bf16.msra.mxu0 %v1254
    %1288 = vmatprep.subr.bf16.mxu0 %v1253
    %1289 = vmatpush1.bf16.msra.mxu0 %v1252
    %1290 = vmatprep.subr.bf16.mxu0 %v1251
    %1291 = vmatpush1.bf16.msra.mxu0 %v1250
    %1292 = vmatprep.subr.bf16.mxu0 0
    %1293 = vmatpush2.bf16.msra.mxu0 0
    %1294 = vmatprep.subr.bf16.mxu0 0
    %1295 = vmatpush2.bf16.msra.mxu0 0
    %1296 = vmatprep.subr.bf16.mxu0 0
    %1297 = vmatpush2.bf16.msra.mxu0 0
    %1298 = vmatprep.subr.bf16.mxu0 0
    %1299 = vmatpush2.bf16.msra.mxu0 0
    %1300 = vmatprep.subr.bf16.mxu0 0
    %1301 = vmatpush2.bf16.msra.mxu0 0
    %1302 = vmatprep.subr.bf16.mxu0 0
    %1303 = vmatpush2.bf16.msra.mxu0 0
    %1304 = vmatprep.subr.bf16.mxu0 0
    %1305 = vmatpush2.bf16.msra.mxu0 0
    %1306 = vmatprep.subr.bf16.mxu0 0
    %1307 = vmatpush2.bf16.msra.mxu0 0
    %1308 = vmatprep.mubr.bf16.mxu0 0
    %1309 = vmatmul.mubr.bf16.gmra.mxu0 %v877
    %v1310 = vpop.f32.mrf.mxu0
    %v1311 = vadd.f32 %v1271, %v1310
    %v1312 = vpop.f32.mrf.mxu0
    %v1313 = vadd.f32 %v1275, %v1312
    %v1314 = vpop.f32.mrf.mxu0
    %v1315 = vadd.f32 %v1271, %v1314
    %v1316 = vpop.f32.mrf.mxu0
    %v1317 = vadd.f32 %v1275, %v1316
    %1318 = vmatprep.mubr.bf16.mxu0 0
    %1319 = vmatmul.mubr.bf16.gmra.mxu0 %v880
    %v1320 = vpop.f32.mrf.mxu0
    %v1321 = vadd.f32 %v1271, %v1320
    %v1322 = vpop.f32.mrf.mxu0
    %v1323 = vadd.f32 %v1275, %v1322
    %v1324 = vpop.f32.mrf.mxu0
    %v1325 = vadd.f32 %v1271, %v1324
    %v1326 = vpop.f32.mrf.mxu0
    %v1327 = vadd.f32 %v1275, %v1326
    %1328 = vmatprep.mubr.bf16.mxu0 0
    %1329 = vmatmul.mubr.bf16.gmra.mxu0 %v883
    %v1330 = vpop.f32.mrf.mxu0
    %v1331 = vadd.f32 %v1271, %v1330
    %v1332 = vpop.f32.mrf.mxu0
    %v1333 = vadd.f32 %v1275, %v1332
    %v1334 = vpop.f32.mrf.mxu0
    %v1335 = vadd.f32 %v1271, %v1334
    %v1336 = vpop.f32.mrf.mxu0
    %v1337 = vadd.f32 %v1275, %v1336
    %1338 = vmatprep.mubr.bf16.mxu0 0
    %1339 = vmatmul.mubr.bf16.gmra.mxu0 %v886
    %v1340 = vpop.f32.mrf.mxu0
    %v1341 = vadd.f32 %v1271, %v1340
    %v1342 = vpop.f32.mrf.mxu0
    %v1343 = vadd.f32 %v1275, %v1342
    %v1344 = vpop.f32.mrf.mxu0
    %v1345 = vadd.f32 %v1271, %v1344
    %v1346 = vpop.f32.mrf.mxu0
    %v1347 = vadd.f32 %v1275, %v1346
    %1348 = vdwg.mxu0
    %v1349 = vmax.f32 %v1311, 0.0
    %v1350 = vmax.f32 %v1313, 0.0
    %v1351 = vmax.f32 %v1315, 0.0
    %v1352 = vmax.f32 %v1317, 0.0
    %v1353 = vmax.f32 %v1321, 0.0
    %v1354 = vmax.f32 %v1323, 0.0
    %v1355 = vmax.f32 %v1325, 0.0
    %v1356 = vmax.f32 %v1327, 0.0
    %v1357 = vmax.f32 %v1331, 0.0
    %v1358 = vmax.f32 %v1333, 0.0
    %v1359 = vmax.f32 %v1335, 0.0
    %v1360 = vmax.f32 %v1337, 0.0
    %v1361 = vmax.f32 %v1341, 0.0
    %v1362 = vmax.f32 %v1343, 0.0
    %v1363 = vmax.f32 %v1345, 0.0
    %v1364 = vmax.f32 %v1347, 0.0
    %v1365 = vpack.c.bf16 %v1351, %v1349
    %v1366 = vpack.c.bf16 %v1352, %v1350
    %v1367 = vpack.c.bf16 %v1355, %v1353
    %v1368 = vpack.c.bf16 %v1356, %v1354
    %v1369 = vpack.c.bf16 %v1359, %v1357
    %v1370 = vpack.c.bf16 %v1360, %v1358
    %v1371 = vpack.c.bf16 %v1363, %v1361
    %v1372 = vpack.c.bf16 %v1364, %v1362
    %v1373 = vld [vmem:[%s6] sm:$0xf]
    %v1374 = vld [vmem:[%s6 + $0x4] sm:$0xf]
    %v1375 = vld [vmem:[%s6 + $0x8] sm:$0xf]
    %v1376 = vld [vmem:[%s6 + $0xc] sm:$0xf]
    %v1377 = vld [vmem:[%s6 + $0x10] sm:$0xf]
    %v1378 = vld [vmem:[%s6 + $0x14] sm:$0xf]
    %v1379 = vld [vmem:[%s6 + $0x18] sm:$0xf]
    %v1380 = vld [vmem:[%s6 + $0x1c] sm:$0xf]
    %v1381 = vld [vmem:[%s6 + $0x20] sm:$0xf]
    %v1382 = vld [vmem:[%s6 + $0x24] sm:$0xf]
    %v1383 = vld [vmem:[%s6 + $0x28] sm:$0xf]
    %v1384 = vld [vmem:[%s6 + $0x2c] sm:$0xf]
    %v1385 = vld [vmem:[%s6 + $0x30] sm:$0xf]
    %v1386 = vld [vmem:[%s6 + $0x34] sm:$0xf]
    %v1387 = vld [vmem:[%s6 + $0x38] sm:$0xf]
    %v1388 = vld [vmem:[%s6 + $0x3c] sm:$0xf]
    %v1389 = vld [vmem:[%s6 + $0x40] sm:$0xf]
    %v1390 = vld [vmem:[%s6 + $0x44] sm:$0xf]
    %v1391 = vld [vmem:[%s6 + $0x48] sm:$0xf]
    %v1392 = vld [vmem:[%s6 + $0x4c] sm:$0xf]
    %v1393 = vld [vmem:[%s6 + $0x50] sm:$0xf]
    %v1394 = vld [vmem:[%s6 + $0x54] sm:$0xf]
    %v1395 = vld [vmem:[%s6 + $0x58] sm:$0xf]
    %v1396 = vld [vmem:[%s6 + $0x5c] sm:$0xf]
    %v1397 = vld [vmem:[%s6 + $0x60] sm:$0xf]
    %v1398 = vld [vmem:[%s6 + $0x64] sm:$0xf]
    %v1399 = vld [vmem:[%s6 + $0x68] sm:$0xf]
    %v1400 = vld [vmem:[%s6 + $0x6c] sm:$0xf]
    %v1401 = vld [vmem:[%s6 + $0x70] sm:$0xf]
    %v1402 = vld [vmem:[%s6 + $0x74] sm:$0xf]
    %v1403 = vld [vmem:[%s6 + $0x78] sm:$0xf]
    %v1404 = vld [vmem:[%s6 + $0x7c] sm:$0xf]
    %v1437 = vunpack.c.l.b16 %v1373
    %v1438 = vunpack.c.l.b16 %v1374
    %v1439 = vunpack.c.l.b16 %v1375
    %v1440 = vunpack.c.l.b16 %v1376
    %v1441 = vunpack.c.l.b16 %v1377
    %v1442 = vunpack.c.l.b16 %v1378
    %v1443 = vunpack.c.l.b16 %v1379
    %v1444 = vunpack.c.l.b16 %v1380
    %v1445 = vunpack.c.l.b16 %v1381
    %v1446 = vunpack.c.l.b16 %v1382
    %v1447 = vunpack.c.l.b16 %v1383
    %v1448 = vunpack.c.l.b16 %v1384
    %v1449 = vunpack.c.l.b16 %v1385
    %v1450 = vunpack.c.l.b16 %v1386
    %v1451 = vunpack.c.l.b16 %v1387
    %v1452 = vunpack.c.l.b16 %v1388
    %v1453 = vunpack.c.l.b16 %v1389
    %v1454 = vunpack.c.l.b16 %v1390
    %v1455 = vunpack.c.l.b16 %v1391
    %v1456 = vunpack.c.l.b16 %v1392
    %v1457 = vunpack.c.l.b16 %v1393
    %v1458 = vunpack.c.l.b16 %v1394
    %v1459 = vunpack.c.l.b16 %v1395
    %v1460 = vunpack.c.l.b16 %v1396
    %v1461 = vunpack.c.l.b16 %v1397
    %v1462 = vunpack.c.l.b16 %v1398
    %v1463 = vunpack.c.l.b16 %v1399
    %v1464 = vunpack.c.l.b16 %v1400
    %v1465 = vunpack.c.l.b16 %v1401
    %v1466 = vunpack.c.l.b16 %v1402
    %v1467 = vunpack.c.l.b16 %v1403
    %v1468 = vunpack.c.l.b16 %v1404
    %v1469 = vpack.c.b16 %v1438, %v1437
    %v1470 = vpack.c.b16 %v1440, %v1439
    %v1471 = vpack.c.b16 %v1442, %v1441
    %v1472 = vpack.c.b16 %v1444, %v1443
    %v1473 = vpack.c.b16 %v1446, %v1445
    %v1474 = vpack.c.b16 %v1448, %v1447
    %v1475 = vpack.c.b16 %v1450, %v1449
    %v1476 = vpack.c.b16 %v1452, %v1451
    %v1477 = vpack.c.b16 %v1454, %v1453
    %v1478 = vpack.c.b16 %v1456, %v1455
    %v1479 = vpack.c.b16 %v1458, %v1457
    %v1480 = vpack.c.b16 %v1460, %v1459
    %v1481 = vpack.c.b16 %v1462, %v1461
    %v1482 = vpack.c.b16 %v1464, %v1463
    %v1483 = vpack.c.b16 %v1466, %v1465
    %v1484 = vpack.c.b16 %v1468, %v1467
    %1501 = vmatprep.subr.bf16.mxu0 0
    %1502 = vmatpush1.bf16.msra.mxu0 %v1476
    %1503 = vmatprep.subr.bf16.mxu0 0
    %1504 = vmatpush1.bf16.msra.mxu0 %v1475
    %1505 = vmatprep.subr.bf16.mxu0 0
    %1506 = vmatpush1.bf16.msra.mxu0 %v1474
    %1507 = vmatprep.subr.bf16.mxu0 0
    %1508 = vmatpush1.bf16.msra.mxu0 %v1473
    %1509 = vmatprep.subr.bf16.mxu0 0
    %1510 = vmatpush1.bf16.msra.mxu0 %v1472
    %1511 = vmatprep.subr.bf16.mxu0 0
    %1512 = vmatpush1.bf16.msra.mxu0 %v1471
    %1513 = vmatprep.subr.bf16.mxu0 0
    %1514 = vmatpush1.bf16.msra.mxu0 %v1470
    %1515 = vmatprep.subr.bf16.mxu0 0
    %1516 = vmatpush1.bf16.msra.mxu0 %v1469
    %1517 = vmatprep.subr.bf16.mxu0 0
    %1518 = vmatpush2.bf16.msra.mxu0 %v1484
    %1519 = vmatprep.subr.bf16.mxu0 0
    %1520 = vmatpush2.bf16.msra.mxu0 %v1483
    %1521 = vmatprep.subr.bf16.mxu0 0
    %1522 = vmatpush2.bf16.msra.mxu0 %v1482
    %1523 = vmatprep.subr.bf16.mxu0 0
    %1524 = vmatpush2.bf16.msra.mxu0 %v1481
    %1525 = vmatprep.subr.bf16.mxu0 0
    %1526 = vmatpush2.bf16.msra.mxu0 %v1480
    %1527 = vmatprep.subr.bf16.mxu0 0
    %1528 = vmatpush2.bf16.msra.mxu0 %v1479
    %1529 = vmatprep.subr.bf16.mxu0 0
    %1530 = vmatpush2.bf16.msra.mxu0 %v1478
    %1531 = vmatprep.subr.bf16.mxu0 0
    %1532 = vmatpush2.bf16.msra.mxu0 %v1477
    %1533 = vmatprep.mubr.bf16.mxu0 %v1366
    %1534 = vmatmul.mubr.bf16.gmra.mxu0 %v1365
    %v1535 = vpop.f32.mrf.mxu0
    %v1536 = vadd.f32 0.0, %v1535
    %v1537 = vpop.f32.mrf.mxu0
    %v1538 = vpop.f32.mrf.mxu0
    %v1539 = vadd.f32 0.0, %v1538
    %v1540 = vpop.f32.mrf.mxu0
    %1541 = vmatprep.mubr.bf16.mxu0 %v1368
    %1542 = vmatmul.mubr.bf16.gmra.mxu0 %v1367
    %v1543 = vpop.f32.mrf.mxu0
    %v1544 = vadd.f32 0.0, %v1543
    %v1545 = vpop.f32.mrf.mxu0
    %v1546 = vpop.f32.mrf.mxu0
    %v1547 = vadd.f32 0.0, %v1546
    %v1548 = vpop.f32.mrf.mxu0
    %1549 = vmatprep.mubr.bf16.mxu0 %v1370
    %1550 = vmatmul.mubr.bf16.gmra.mxu0 %v1369
    %v1551 = vpop.f32.mrf.mxu0
    %v1552 = vadd.f32 0.0, %v1551
    %v1553 = vpop.f32.mrf.mxu0
    %v1554 = vpop.f32.mrf.mxu0
    %v1555 = vadd.f32 0.0, %v1554
    %v1556 = vpop.f32.mrf.mxu0
    %1557 = vmatprep.mubr.bf16.mxu0 %v1372
    %1558 = vmatmul.mubr.bf16.gmra.mxu0 %v1371
    %v1559 = vpop.f32.mrf.mxu0
    %v1560 = vadd.f32 0.0, %v1559
    %v1561 = vpop.f32.mrf.mxu0
    %v1562 = vpop.f32.mrf.mxu0
    %v1563 = vadd.f32 0.0, %v1562
    %v1564 = vpop.f32.mrf.mxu0
    %1565 = vdwg.mxu0
    %v1566 = vpack.c.bf16 %v1539, %v1536
    %v1567 = vpack.c.bf16 %v1547, %v1544
    %v1568 = vpack.c.bf16 %v1555, %v1552
    %v1569 = vpack.c.bf16 %v1563, %v1560
    %v1570 = vlaneseq
    %v1571 = vshrl.u32 %v1570, 7
    %v1572 = vsub.s32 2, %v1571
    %v1573 = vrot.slane %v698, %v1572
    %1574 = vmatprep.subr.bf16.mxu0 0
    %1575 = vmatpush1.bf16.msra.mxu0 0
    %1576 = vmatprep.subr.bf16.mxu0 0
    %1577 = vmatpush1.bf16.msra.mxu0 0
    %1578 = vmatprep.subr.bf16.mxu0 0
    %1579 = vmatpush1.bf16.msra.mxu0 0
    %1580 = vmatprep.subr.bf16.mxu0 0
    %1581 = vmatpush1.bf16.msra.mxu0 0
    %1582 = vmatprep.subr.bf16.mxu0 0
    %1583 = vmatpush1.bf16.msra.mxu0 %v1569
    %1584 = vmatprep.subr.bf16.mxu0 0
    %1585 = vmatpush1.bf16.msra.mxu0 %v1568
    %1586 = vmatprep.subr.bf16.mxu0 0
    %1587 = vmatpush1.bf16.msra.mxu0 %v1567
    %1588 = vmatprep.subr.bf16.mxu0 0
    %1589 = vmatpush1.bf16.msra.mxu0 %v1566
    %1590 = vmatprep.subr.bf16.mxu0 0
    %1591 = vmatpush2.bf16.msra.mxu0 0
    %1592 = vmatprep.subr.bf16.mxu0 0
    %1593 = vmatpush2.bf16.msra.mxu0 0
    %1594 = vmatprep.subr.bf16.mxu0 0
    %1595 = vmatpush2.bf16.msra.mxu0 0
    %1596 = vmatprep.subr.bf16.mxu0 0
    %1597 = vmatpush2.bf16.msra.mxu0 0
    %1598 = vmatprep.subr.bf16.mxu0 0
    %1599 = vmatpush2.bf16.msra.mxu0 0
    %1600 = vmatprep.subr.bf16.mxu0 0
    %1601 = vmatpush2.bf16.msra.mxu0 0
    %1602 = vmatprep.subr.bf16.mxu0 0
    %1603 = vmatpush2.bf16.msra.mxu0 0
    %1604 = vmatprep.subr.bf16.mxu0 0
    %1605 = vmatpush2.bf16.msra.mxu0 0
    %1606 = vmatprep.mubr.bf16.mxu0 0
    %1607 = vmatmul.mubr.bf16.gmra.mxu0 %v877
    %v1608 = vpop.f32.mrf.mxu0
    %v1609 = vadd.f32 %v1573, %v1608
    %v1610 = vpop.f32.mrf.mxu0
    %v1611 = vpop.f32.mrf.mxu0
    %v1612 = vadd.f32 %v1573, %v1611
    %v1613 = vpop.f32.mrf.mxu0
    %1614 = vmatprep.mubr.bf16.mxu0 0
    %1615 = vmatmul.mubr.bf16.gmra.mxu0 %v880
    %v1616 = vpop.f32.mrf.mxu0
    %v1617 = vadd.f32 %v1573, %v1616
    %v1618 = vpop.f32.mrf.mxu0
    %v1619 = vpop.f32.mrf.mxu0
    %v1620 = vadd.f32 %v1573, %v1619
    %v1621 = vpop.f32.mrf.mxu0
    %1622 = vmatprep.mubr.bf16.mxu0 0
    %1623 = vmatmul.mubr.bf16.gmra.mxu0 %v883
    %v1624 = vpop.f32.mrf.mxu0
    %v1625 = vadd.f32 %v1573, %v1624
    %v1626 = vpop.f32.mrf.mxu0
    %v1627 = vpop.f32.mrf.mxu0
    %v1628 = vadd.f32 %v1573, %v1627
    %v1629 = vpop.f32.mrf.mxu0
    %1630 = vmatprep.mubr.bf16.mxu0 0
    %1631 = vmatmul.mubr.bf16.gmra.mxu0 %v886
    %v1632 = vpop.f32.mrf.mxu0
    %v1633 = vadd.f32 %v1573, %v1632
    %v1634 = vpop.f32.mrf.mxu0
    %v1635 = vpop.f32.mrf.mxu0
    %v1636 = vadd.f32 %v1573, %v1635
    %v1637 = vpop.f32.mrf.mxu0
    %1638 = vdwg.mxu0
    %v1639 = vmax.f32 %v1609, 0.0
    %v1640 = vmax.f32 %v1612, 0.0
    %v1641 = vmax.f32 %v1617, 0.0
    %v1642 = vmax.f32 %v1620, 0.0
    %v1643 = vmax.f32 %v1625, 0.0
    %v1644 = vmax.f32 %v1628, 0.0
    %v1645 = vmax.f32 %v1633, 0.0
    %v1646 = vmax.f32 %v1636, 0.0
    %v1647 = vmul.f32 %v1639, %v660
    %v1648 = vmul.f32 %v1640, %v663
    %v1649 = vmul.f32 %v1641, %v668
    %v1650 = vmul.f32 %v1642, %v671
    %v1651 = vmul.f32 %v1643, %v676
    %v1652 = vmul.f32 %v1644, %v679
    %v1653 = vmul.f32 %v1645, %v684
    %v1654 = vmul.f32 %v1646, %v687
    %v1655 = vpack.c.bf16 %v1648, %v1647
    %v1656 = vpack.c.bf16 %v1650, %v1649
    %v1657 = vpack.c.bf16 %v1652, %v1651
    %v1658 = vpack.c.bf16 %v1654, %v1653
    %v1659 = vld [vmem:[%s10] sm:$0xf]
    %v1660 = vld [vmem:[%s10 + $0x4] sm:$0xf]
    %v1661 = vld [vmem:[%s10 + $0x8] sm:$0xf]
    %v1662 = vld [vmem:[%s10 + $0xc] sm:$0xf]
    %v1667 = vunpack.c.l.b16 %v1659
    %v1668 = vunpack.c.l.b16 %v1660
    %v1669 = vunpack.c.l.b16 %v1661
    %v1670 = vunpack.c.l.b16 %v1662
    %v1671 = vpack.c.b16 %v1668, %v1667
    %v1672 = vpack.c.b16 %v1670, %v1669
    %v1674 = vsel %vm875, %v1671, 0
    %v1677 = vsel %vm875, %v1672, 0
    %1679 = vmatprep.subr.bf16.mxu0 0
    %1680 = vmatpush1.bf16.msra.mxu0 0
    %1681 = vmatprep.subr.bf16.mxu0 0
    %1682 = vmatpush1.bf16.msra.mxu0 0
    %1683 = vmatprep.subr.bf16.mxu0 0
    %1684 = vmatpush1.bf16.msra.mxu0 0
    %1685 = vmatprep.subr.bf16.mxu0 0
    %1686 = vmatpush1.bf16.msra.mxu0 0
    %1687 = vmatprep.subr.bf16.mxu0 0
    %1688 = vmatpush1.bf16.msra.mxu0 %v1658
    %1689 = vmatprep.subr.bf16.mxu0 0
    %1690 = vmatpush1.bf16.msra.mxu0 %v1657
    %1691 = vmatprep.subr.bf16.mxu0 0
    %1692 = vmatpush1.bf16.msra.mxu0 %v1656
    %1693 = vmatprep.subr.bf16.mxu0 0
    %1694 = vmatpush1.bf16.msra.mxu0 %v1655
    %1695 = vmatprep.subr.bf16.mxu0 0
    %1696 = vmatpush2.bf16.msra.mxu0 0
    %1697 = vmatprep.subr.bf16.mxu0 0
    %1698 = vmatpush2.bf16.msra.mxu0 0
    %1699 = vmatprep.subr.bf16.mxu0 0
    %1700 = vmatpush2.bf16.msra.mxu0 0
    %1701 = vmatprep.subr.bf16.mxu0 0
    %1702 = vmatpush2.bf16.msra.mxu0 0
    %1703 = vmatprep.subr.bf16.mxu0 0
    %1704 = vmatpush2.bf16.msra.mxu0 0
    %1705 = vmatprep.subr.bf16.mxu0 0
    %1706 = vmatpush2.bf16.msra.mxu0 0
    %1707 = vmatprep.subr.bf16.mxu0 0
    %1708 = vmatpush2.bf16.msra.mxu0 0
    %1709 = vmatprep.subr.bf16.mxu0 0
    %1710 = vmatpush2.bf16.msra.mxu0 0
    %1711 = vmatprep.mubr.bf16.mxu0 0
    %1712 = vmatmul.mubr.bf16.gmra.mxu0 %v1674
    %v1713 = vpop.f32.mrf.mxu0
    %v1714 = vadd.f32 0.0, %v1713
    %v1715 = vpop.f32.mrf.mxu0
    %v1716 = vpop.f32.mrf.mxu0
    %v1717 = vadd.f32 0.0, %v1716
    %v1718 = vpop.f32.mrf.mxu0
    %1719 = vmatprep.mubr.bf16.mxu0 0
    %1720 = vmatmul.mubr.bf16.gmra.mxu0 %v1677
    %v1721 = vpop.f32.mrf.mxu0
    %v1722 = vadd.f32 0.0, %v1721
    %v1723 = vpop.f32.mrf.mxu0
    %v1724 = vpop.f32.mrf.mxu0
    %v1725 = vadd.f32 0.0, %v1724
    %v1726 = vpop.f32.mrf.mxu0
    %1727 = vdwg.mxu0
    %v1728 = vpack.c.bf16 %v1717, %v1714
    %v1729 = vpack.c.bf16 %v1725, %v1722
    %v1730 = vld [vmem:[%s9] sm:$0xf]
    %v1731 = vld [vmem:[%s9 + $0x4] sm:$0xf]
    %v1732 = vld [vmem:[%s9 + $0x8] sm:$0xf]
    %v1733 = vld [vmem:[%s9 + $0xc] sm:$0xf]
    %v1734 = vld [vmem:[%s9 + $0x10] sm:$0xf]
    %v1735 = vld [vmem:[%s9 + $0x14] sm:$0xf]
    %v1736 = vld [vmem:[%s9 + $0x18] sm:$0xf]
    %v1737 = vld [vmem:[%s9 + $0x1c] sm:$0xf]
    %v1738 = vld [vmem:[%s9 + $0x20] sm:$0xf]
    %v1739 = vld [vmem:[%s9 + $0x24] sm:$0xf]
    %v1740 = vld [vmem:[%s9 + $0x28] sm:$0xf]
    %v1741 = vld [vmem:[%s9 + $0x2c] sm:$0xf]
    %v1742 = vld [vmem:[%s9 + $0x30] sm:$0xf]
    %v1743 = vld [vmem:[%s9 + $0x34] sm:$0xf]
    %v1744 = vld [vmem:[%s9 + $0x38] sm:$0xf]
    %v1745 = vld [vmem:[%s9 + $0x3c] sm:$0xf]
    %v1762 = vunpack.c.l.b16 %v1730
    %v1763 = vunpack.c.l.b16 %v1731
    %v1764 = vunpack.c.l.b16 %v1732
    %v1765 = vunpack.c.l.b16 %v1733
    %v1766 = vunpack.c.l.b16 %v1734
    %v1767 = vunpack.c.l.b16 %v1735
    %v1768 = vunpack.c.l.b16 %v1736
    %v1769 = vunpack.c.l.b16 %v1737
    %v1770 = vunpack.c.l.b16 %v1738
    %v1771 = vunpack.c.l.b16 %v1739
    %v1772 = vunpack.c.l.b16 %v1740
    %v1773 = vunpack.c.l.b16 %v1741
    %v1774 = vunpack.c.l.b16 %v1742
    %v1775 = vunpack.c.l.b16 %v1743
    %v1776 = vunpack.c.l.b16 %v1744
    %v1777 = vunpack.c.l.b16 %v1745
    %v1778 = vpack.c.b16 %v1763, %v1762
    %v1779 = vpack.c.b16 %v1765, %v1764
    %v1780 = vpack.c.b16 %v1767, %v1766
    %v1781 = vpack.c.b16 %v1769, %v1768
    %v1782 = vpack.c.b16 %v1771, %v1770
    %v1783 = vpack.c.b16 %v1773, %v1772
    %v1784 = vpack.c.b16 %v1775, %v1774
    %v1785 = vpack.c.b16 %v1777, %v1776
    %1794 = vmatprep.subr.bf16.mxu0 0
    %1795 = vmatpush1.bf16.msra.mxu0 %v1785
    %1796 = vmatprep.subr.bf16.mxu0 0
    %1797 = vmatpush1.bf16.msra.mxu0 %v1784
    %1798 = vmatprep.subr.bf16.mxu0 0
    %1799 = vmatpush1.bf16.msra.mxu0 %v1783
    %1800 = vmatprep.subr.bf16.mxu0 0
    %1801 = vmatpush1.bf16.msra.mxu0 %v1782
    %1802 = vmatprep.subr.bf16.mxu0 0
    %1803 = vmatpush1.bf16.msra.mxu0 %v1781
    %1804 = vmatprep.subr.bf16.mxu0 0
    %1805 = vmatpush1.bf16.msra.mxu0 %v1780
    %1806 = vmatprep.subr.bf16.mxu0 0
    %1807 = vmatpush1.bf16.msra.mxu0 %v1779
    %1808 = vmatprep.subr.bf16.mxu0 0
    %1809 = vmatpush1.bf16.msra.mxu0 %v1778
    %1810 = vmatprep.subr.bf16.mxu0 0
    %1811 = vmatpush2.bf16.msra.mxu0 0
    %1812 = vmatprep.subr.bf16.mxu0 0
    %1813 = vmatpush2.bf16.msra.mxu0 0
    %1814 = vmatprep.subr.bf16.mxu0 0
    %1815 = vmatpush2.bf16.msra.mxu0 0
    %1816 = vmatprep.subr.bf16.mxu0 0
    %1817 = vmatpush2.bf16.msra.mxu0 0
    %1818 = vmatprep.subr.bf16.mxu0 0
    %1819 = vmatpush2.bf16.msra.mxu0 0
    %1820 = vmatprep.subr.bf16.mxu0 0
    %1821 = vmatpush2.bf16.msra.mxu0 0
    %1822 = vmatprep.subr.bf16.mxu0 0
    %1823 = vmatpush2.bf16.msra.mxu0 0
    %1824 = vmatprep.subr.bf16.mxu0 0
    %1825 = vmatpush2.bf16.msra.mxu0 0
    %1826 = vmatprep.mubr.bf16.mxu0 0
    %1827 = vmatmul.mubr.bf16.gmra.mxu0 %v1728
    %v1828 = vpop.f32.mrf.mxu0
    %v1829 = vadd.f32 0.0, %v1828
    %v1830 = vpop.f32.mrf.mxu0
    %v1831 = vpop.f32.mrf.mxu0
    %v1832 = vadd.f32 0.0, %v1831
    %v1833 = vpop.f32.mrf.mxu0
    %1834 = vmatprep.mubr.bf16.mxu0 0
    %1835 = vmatmul.mubr.bf16.gmra.mxu0 %v1729
    %v1836 = vpop.f32.mrf.mxu0
    %v1837 = vadd.f32 0.0, %v1836
    %v1838 = vpop.f32.mrf.mxu0
    %v1839 = vpop.f32.mrf.mxu0
    %v1840 = vadd.f32 0.0, %v1839
    %v1841 = vpop.f32.mrf.mxu0
    %1842 = vdwg.mxu0
    %v1843 = vmul.f32 %v1829, %v1837
    %v1844 = vmul.f32 %v1832, %v1840
    %v1845 = vlaneseq
    %v1846 = vshrl.u32 %v1845, 7
    %v1847 = vsub.s32 4, %v1846
    %v1848 = vrot.slane %v114, %v1847
    %v1849 = vmul.f32 %v1843, %v1848
    %v1850 = vmul.f32 %v1844, %v1848
    %v1851 = vsel %vm123, %v1849, 0.0
    %1852 = vadd.xlane.f32.xlu0 %v1851
    %v1853 = vpop.xlane.xlu0 %1852
    %v1854 = vsel %vm123, %v1850, 0.0
    %1855 = vadd.xlane.f32.xlu0 %v1854
    %v1856 = vpop.xlane.xlu0 %1855
    %v1857 = vlaneseq
    %v1858 = vshrl.u32 %v1857, 7
    %v1859 = vsub.s32 5, %v1858
    %v1860 = vrot.slane %v114, %v1859
    %v1861 = vadd.f32 %v1853, %v1860
    %v1862 = vadd.f32 %v1856, %v1860
    %1864 = vset.pattern.permute.xlu0 0
    %1865 = vperm.xlu0 %1864, %v1861
    %v1866 = vpop.permute.xlu0 %1865
    %1869 = vset.pattern.permute.xlu0 0
    %1870 = vperm.xlu0 %1869, %v1862
    %v1871 = vpop.permute.xlu0 %1870
    %1873 = vst [vmem:[#allocation13] sm:$0xff] %v1866
    %1874 = vst [vmem:[#allocation13 + $0x8] sm:$0xff] %v1871
    // Predicated region
    $region70: #{tpu_custom_call.1} parent=1 // pred_check
      _
    $region71: #{tpu_custom_call.1} parent=1 // pred_check_branch
      %1876 = sbr.rel (0) target = $region73
    $region72: #{tpu_custom_call.1} parent=1 // pred_region
      %s1878 = ssub.s32 256, 256
      %1879 = vsyncadd [#allocation4], %s1878
      %s1880 = sshll.u32 [#allocation13], 4
      %s1881 = int_to_ptr.vmem [resolvable:$true] %s1880
      %1886 = dma.vmem_to_hbm [thread:$0]  %s1881, 256, %s11, [#allocation4], 128, 128, 8
    $region73: #{tpu_custom_call.1} parent=1 // pred_fallthru
      _
    // Predicated region
    $region74: #{tpu_custom_call.1} parent=1 // pred_check
      _
    $region75: #{tpu_custom_call.1} parent=1 // pred_check_branch
      %1888 = sbr.rel (0) target = $region77
    $region76: #{tpu_custom_call.1} parent=1 // pred_region
      %1889 = dma.done [#allocation4], 256
    $region77: #{tpu_custom_call.1} parent=1 // pred_fallthru
      _
    %1890 = vsyncpa [#allocation3], 1
    %1891 = vsyncpa [#allocation6], 1
    %1892 = vsyncpa [#allocation9], 1
    %1893 = vsyncpa [#allocation12], 1
    %1894 = vsyncpa [#allocation4], 1

</llo_original>
